<compile_context>
chip_gen: v7x
topology: tpu7x:2x2x1
jax: 0.10.0
libtpu: 0.0.40
codegen_flags: <defaults>
</compile_context>

<pallas_src>
import functools
import math

import numpy as np

import jax
import jax.numpy as jnp
from jax.experimental import pallas as pl
from jax.experimental.pallas import tpu as pltpu


_LANE = 128          # lane-padded working width for all feature tensors
_DP = 256            # quadratic-form width of the SPD epilogue (216 -> 2 vregs)


# ------------------------------ fused kernel --------------------------------

def _fused_gnn_kernel(
        # scalar-prefetch (SMEM, int32)
        src_ref, dst_ref, bat_ref,
        # inputs (VMEM)
        invc_ref, node_in_ref, sh_ref, ef_ref,
        w1_ref, w2_ref, wsh_ref, wm_ref, ws_ref, bias_ref,
        ro_w1_ref, ro_w2_ref, wlr_ref, red_ref, ro_bias_ref,
        # output (VMEM, lane-padded Mandel vector per graph)
        out_ref,
        # scratch (VMEM, persistent across the layer grid)
        node_ref, xsrc_ref, msg_ref, agg_ref, ro_ref, gacc_ref,
        *, inv_agg_norm):
    f32, bf16 = jnp.float32, jnp.bfloat16
    l = pl.program_id(0)
    n_layers = pl.num_programs(0)
    num_edges = xsrc_ref.shape[0]
    num_nodes = node_ref.shape[0]

    # Layer 0: load the (lane-padded) input node features into the resident
    # VMEM node-state scratch; it carries across the layer grid steps.
    @pl.when(l == 0)
    def _():
        node_ref[...] = node_in_ref[...]

    x = node_ref[...]                                         # (N, 128) f32

    # ---- gather x[src]: index-driven, src indices read from SMEM ----------
    @pl.loop(0, num_edges)
    def _(e):
        xsrc_ref[pl.ds(e, 1), :] = node_ref[pl.ds(src_ref[e], 1), :]

    # ---- edge MLP on radial feats + SH mixing (bf16 MXU, f32 accumulate) --
    b1 = bias_ref[0:1, :]
    b2 = bias_ref[1:2, :]
    bn = bias_ref[2:3, :]
    h = jax.nn.silu(
        jnp.dot(ef_ref[...], w1_ref[...], preferred_element_type=f32) + b1)
    # split matmuls instead of a lane concat of [h | sh]
    w = (jnp.dot(h.astype(bf16), w2_ref[...], preferred_element_type=f32)
         + jnp.dot(sh_ref[...], wsh_ref[...], preferred_element_type=f32) + b2)
    msg_ref[...] = w * xsrc_ref[...]                          # per-edge messages
    # TODO(synk): MACE's higher-order `correlation` tensor contraction has no
    # clean dense Pallas equivalent without e3nn CG coefficients.

    # ---- scatter-add messages to dst nodes: segment sum in VMEM -----------
    agg_ref[...] = jnp.zeros_like(agg_ref)

    @pl.loop(0, num_edges)
    def _(e):
        d = dst_ref[e]
        agg_ref[pl.ds(d, 1), :] = (agg_ref[pl.ds(d, 1), :]
                                   + msg_ref[pl.ds(e, 1), :])

    agg = agg_ref[...] * inv_agg_norm

    # ---- node update (split matmuls); residual only for layers > 0 --------
    upd = jax.nn.silu(
        jnp.dot(agg.astype(bf16), wm_ref[...], preferred_element_type=f32)
        + jnp.dot(x.astype(bf16), ws_ref[...], preferred_element_type=f32) + bn)

    @pl.when(l == 0)
    def _():
        node_ref[...] = upd

    @pl.when(l > 0)
    def _():
        node_ref[...] = x + upd

    # ---- last layer only: readout -> mean pool -> folded tail -> SPD ------
    @pl.when(l == n_layers - 1)
    def _():
        rb1 = ro_bias_ref[:, 0:_LANE]
        rb2 = ro_bias_ref[:, _LANE:2 * _LANE]
        blr = ro_bias_ref[:, 2 * _LANE:2 * _LANE + 2 * _DP]
        eye_eps = ro_bias_ref[:, 2 * _LANE + 2 * _DP:3 * _LANE + 2 * _DP]

        nf = node_ref[...]
        hh = jax.nn.silu(
            jnp.dot(nf.astype(bf16), ro_w1_ref[...],
                    preferred_element_type=f32) + rb1)
        ro_ref[...] = (jnp.dot(hh.astype(bf16), ro_w2_ref[...],
                               preferred_element_type=f32) + rb2)

        # global mean pool: index-driven segment sum over nodes, scaled by the
        # precomputed inverse per-graph node counts (no [G,N] pool matrix).
        gacc_ref[...] = jnp.zeros_like(gacc_ref)

        @pl.loop(0, num_nodes)
        def _(n):
            g = bat_ref[n]
            gacc_ref[pl.ds(g, 1), :] = (gacc_ref[pl.ds(g, 1), :]
                                        + ro_ref[pl.ds(n, 1), :])

        gmean = gacc_ref[...] * invc_ref[...]                 # (G, 128)

        # folded tail: o3.Linear -> sph->cart -> Mandel -> symmetrize ->
        # S@S + eps*I, expressed as ((g@W_L+b_L) * (g@W_R+b_R)) @ Red + eps*I.
        ab = (jnp.dot(gmean.astype(bf16), wlr_ref[...],
                      preferred_element_type=f32) + blr)
        a = ab[:, 0:_DP]
        b = ab[:, _DP:2 * _DP]
        out_ref[...] = (jnp.dot((a * b).astype(bf16), red_ref[...],
                                preferred_element_type=f32) + eye_eps)


# ------------------------------ parameters ----------------------------------

def _pad2(a, rows=_LANE, cols=_LANE):
    return jnp.pad(a, ((0, rows - a.shape[0]), (0, cols - a.shape[1])))


def make_params(key, hidden=32, edge_feat_dim=16, sh_dim=9, mlp_dim=32,
                readout_dim=21, num_layers=2, eps=1e-3):
    def lin(k, fan_in, fan_out):
        return jax.random.normal(k, (fan_in, fan_out), jnp.float32) / math.sqrt(fan_in)

    keys = jax.random.split(key, 5 * num_layers + 4)
    w1s, w2s, wshs, wms, wss, biases = [], [], [], [], [], []
    ki = 0
    for _ in range(num_layers):
        w1s.append(_pad2(lin(keys[ki + 0], edge_feat_dim, mlp_dim)))
        w2s.append(_pad2(lin(keys[ki + 1], mlp_dim, hidden)))
        wshs.append(_pad2(lin(keys[ki + 2], sh_dim, hidden)))
        wms.append(_pad2(lin(keys[ki + 3], hidden, hidden)))
        wss.append(_pad2(lin(keys[ki + 4], hidden, hidden)))
        # packed per-layer biases [b1; b2; b_node], each lane-padded to 128
        biases.append(jnp.zeros((3, _LANE), jnp.float32))
        ki += 5

    p = {
        "w1": jnp.stack(w1s).astype(jnp.bfloat16),           # (L,128,128)
        "w2": jnp.stack(w2s).astype(jnp.bfloat16),
        "wsh": jnp.stack(wshs).astype(jnp.bfloat16),
        "wm": jnp.stack(wms).astype(jnp.bfloat16),
        "ws": jnp.stack(wss).astype(jnp.bfloat16),
        "bias": jnp.stack(biases),                            # (L,3,128) f32
    }

    ro_w1 = lin(keys[ki + 0], hidden, hidden)
    ro_b1 = jnp.zeros((1, hidden), jnp.float32)
    ro_w2 = lin(keys[ki + 1], hidden, readout_dim)
    ro_b2 = jnp.zeros((1, readout_dim), jnp.float32)
    lin_w = lin(keys[ki + 2], readout_dim, 21)                # -> 2x0e+2x2e+1x4e
    lin_b = jnp.zeros((1, 21), jnp.float32)

    # Spherical (2x0e+2x2e+1x4e) -> Cartesian rank-4 change of basis.
    # TODO(synk): exact e3nn change-of-basis coefficients unavailable; using a
    # deterministic dense stand-in matrix of the correct shape [21, 81].
    sph2cart = jax.random.normal(keys[ki + 3], (21, 81), jnp.float32) / math.sqrt(21.0)

    # Cartesian rank-4 -> Mandel 6x6 (exact selection + sqrt(2) scaling).
    pairs = [(0, 0), (1, 1), (2, 2), (1, 2), (0, 2), (0, 1)]
    facs = [1.0, 1.0, 1.0, math.sqrt(2.0), math.sqrt(2.0), math.sqrt(2.0)]
    c2m = np.zeros((81, 36), np.float32)
    for I in range(6):
        for J in range(6):
            i1, i2 = pairs[I]
            j1, j2 = pairs[J]
            flat4 = ((i1 * 3 + i2) * 3 + j1) * 3 + j2
            c2m[flat4, I * 6 + J] = facs[I] * facs[J]
    cart2mandel = jnp.asarray(c2m)

    # Fold the constant chain: readout features -> Mandel-flat 36-vector.
    w_tail = lin_w @ sph2cart @ cart2mandel                   # (R, 36)
    b_tail = lin_b @ sph2cart @ cart2mandel                   # (1, 36)

    # SPD epilogue as constant maps on the flat 36-vector.
    # TODO(synk): exact PositiveLayer definition unavailable; symmetrize +
    # matrix-square + eps*I is used as a deterministic SPD surrogate.
    perm = np.zeros((36, 36), np.float32)
    for i in range(6):
        for j in range(6):
            perm[6 * i + j, 6 * j + i] = 1.0
    psym = 0.5 * (np.eye(36, dtype=np.float32) + perm)
    lbig = np.zeros((36, _DP), np.float32)
    rbig = np.zeros((36, _DP), np.float32)
    red = np.zeros((_DP, 36), np.float32)
    for j in range(6):
        for i in range(6):
            for k in range(6):
                col = j * 36 + 6 * i + k
                lbig[6 * i + j, col] = 1.0
                rbig[6 * j + k, col] = 1.0
                red[col, 6 * i + k] = 1.0
    psl = jnp.asarray(psym @ lbig)                            # (36, DP)
    psr = jnp.asarray(psym @ rbig)
    w_l = w_tail @ psl                                        # (R, DP)
    w_r = w_tail @ psr
    b_l = b_tail @ psl                                        # (1, DP)
    b_r = b_tail @ psr
    eye_eps = eps * jnp.eye(6, dtype=jnp.float32).reshape(1, 36)

    wlr = jnp.concatenate([w_l, w_r], axis=1)                 # (R, 2*DP)
    p["ro_w1"] = _pad2(ro_w1).astype(jnp.bfloat16)            # (128,128)
    p["ro_w2"] = _pad2(ro_w2).astype(jnp.bfloat16)            # (128,128)
    p["wlr"] = jnp.pad(wlr, ((0, _LANE - wlr.shape[0]), (0, 0))).astype(jnp.bfloat16)
    p["red"] = jnp.pad(jnp.asarray(red), ((0, 0), (0, _LANE - 36))).astype(jnp.bfloat16)
    p["ro_bias"] = jnp.concatenate([
        jnp.pad(ro_b1, ((0, 0), (0, _LANE - hidden))),
        jnp.pad(ro_b2, ((0, 0), (0, _LANE - readout_dim))),
        jnp.concatenate([b_l, b_r], axis=1),
        jnp.pad(eye_eps, ((0, 0), (0, _LANE - 36))),
    ], axis=1)                                                # (1, 3*128+2*DP) f32
    return p


# ------------------------------ forward pass ---------------------------------

@functools.partial(jax.jit,
                   static_argnames=("num_graphs", "num_nodes", "agg_norm_const"))
def gnn_head_forward(params, edge_index, node_ft, edge_sh, edge_feats,
                     batch_idx, num_graphs, num_nodes, agg_norm_const=10.0):
    E = edge_feats.shape[0]
    N = num_nodes
    G = num_graphs
    L = params["w1"].shape[0]

    def pad_lanes(a):
        return jnp.pad(a, ((0, 0), (0, _LANE - a.shape[-1])))

    node_in = pad_lanes(node_ft.astype(jnp.float32))          # (N,128) f32
    sh = pad_lanes(edge_sh.astype(jnp.float32)).astype(jnp.bfloat16)
    ef = pad_lanes(edge_feats.astype(jnp.float32)).astype(jnp.bfloat16)

    src = edge_index[0].astype(jnp.int32)                     # (E,) scalar prefetch
    dst = edge_index[1].astype(jnp.int32)                     # (E,)
    batch = batch_idx.astype(jnp.int32)                       # (N,)
    counts = jnp.zeros((G,), jnp.float32).at[batch].add(1.0)
    invc = (1.0 / jnp.maximum(counts, 1.0)).reshape(G, 1)     # (G,1) f32

    kern = functools.partial(_fused_gnn_kernel,
                             inv_agg_norm=1.0 / float(agg_norm_const))

    def _const(l, *prefetch):            # graph-level / readout blocks: resident
        return (0, 0)

    def _per_layer(l, *prefetch):        # stacked per-layer weight blocks
        return (l, 0, 0)

    grid_spec = pltpu.PrefetchScalarGridSpec(
        num_scalar_prefetch=3,                                 # src, dst, batch -> SMEM
        grid=(L,),                                             # sequential layer axis
        in_specs=[
            pl.BlockSpec((G, 1), _const),                      # inverse node counts
            pl.BlockSpec((N, _LANE), _const),                  # node features
            pl.BlockSpec((E, _LANE), _const),                  # edge spherical harmonics
            pl.BlockSpec((E, _LANE), _const),                  # edge radial features
            pl.BlockSpec((None, _LANE, _LANE), _per_layer),    # w1
            pl.BlockSpec((None, _LANE, _LANE), _per_layer),    # w2
            pl.BlockSpec((None, _LANE, _LANE), _per_layer),    # wsh
            pl.BlockSpec((None, _LANE, _LANE), _per_layer),    # wm
            pl.BlockSpec((None, _LANE, _LANE), _per_layer),    # ws
            pl.BlockSpec((None, 3, _LANE), _per_layer),        # packed layer biases
            pl.BlockSpec((_LANE, _LANE), _const),              # ro_w1
            pl.BlockSpec((_LANE, _LANE), _const),              # ro_w2
            pl.BlockSpec((_LANE, 2 * _DP), _const),            # folded tail W_L|W_R
            pl.BlockSpec((_DP, _LANE), _const),                # quadratic-form reduce
            pl.BlockSpec((1, 3 * _LANE + 2 * _DP), _const),    # packed readout biases
        ],
        out_specs=pl.BlockSpec((G, _LANE), _const),
        scratch_shapes=[
            pltpu.VMEM((N, _LANE), jnp.float32),   # node state (carried over layers)
            pltpu.VMEM((E, _LANE), jnp.float32),   # gathered x[src]
            pltpu.VMEM((E, _LANE), jnp.float32),   # per-edge messages
            pltpu.VMEM((N, _LANE), jnp.float32),   # aggregated messages
            pltpu.VMEM((N, _LANE), jnp.float32),   # readout features
            pltpu.VMEM((G, _LANE), jnp.float32),   # pooled graph features
        ],
    )

    out = pl.pallas_call(
        kern,
        out_shape=jax.ShapeDtypeStruct((G, _LANE), jnp.float32),
        grid_spec=grid_spec,
        compiler_params=pltpu.CompilerParams(
            dimension_semantics=("arbitrary",),       # layer axis is sequential
            vmem_limit_bytes=32 * 1024 * 1024),
    )(src, dst, batch,
      invc, node_in, sh, ef,
      params["w1"], params["w2"], params["wsh"], params["wm"], params["ws"],
      params["bias"],
      params["ro_w1"], params["ro_w2"], params["wlr"], params["red"],
      params["ro_bias"])

    # lane-dense kernel output; slice the 6x6 Mandel matrix back out
    return out[:, :36].reshape(G, 6, 6)


# --------------------------------- driver ------------------------------------

if __name__ == "__main__":
    key = jax.random.PRNGKey(0)
    k_in, k_par = jax.random.split(key)

    # small synthetic graph batch
    N, E, G = 16, 32, 2            # nodes, edges, graphs
    H, F, S = 32, 16, 9            # hidden scalars (32x0e), 2*num_edge_bases, (lmax+1)^2

    k1, k2, k3, k4 = jax.random.split(k_in, 4)
    edge_index = jax.random.randint(k1, (2, E), 0, N, dtype=jnp.int32)
    node_ft = jax.random.normal(k2, (N, H), jnp.float32)
    edge_sh = jax.random.normal(k3, (E, S), jnp.float32)
    edge_feats = jax.random.normal(k4, (E, F), jnp.float32)
    batch_idx = jnp.concatenate([jnp.zeros(N // 2, jnp.int32),
                                 jnp.ones(N - N // 2, jnp.int32)])

    params = make_params(k_par, hidden=H, edge_feat_dim=F, sh_dim=S,
                         mlp_dim=32, readout_dim=21, num_layers=2)

    C = gnn_head_forward(params, edge_index, node_ft, edge_sh, edge_feats,
                         batch_idx, num_graphs=G, num_nodes=N)
    C = jax.block_until_ready(C)
    assert C.shape == (G, 6, 6) and bool(jnp.all(jnp.isfinite(C)))
    print("KERNEL_OK")
</pallas_src>

<mosaic_0001>
module attributes {stable_mosaic.version = 11 : i64} {
  func.func private @main(%arg0: i32) attributes {dimension_semantics = [#tpu.dimension_semantics<core_parallel>], iteration_bounds = array<i64: 2>, tpu.core_type = #tpu.core_type<sc_scalar_subcore>, window_params = []} {
    return
  }
}

module attributes {stable_mosaic.version = 11 : i64} {
  func.func private @main(%arg0: i32) attributes {dimension_semantics = [#tpu.dimension_semantics<core_parallel>], iteration_bounds = array<i64: 2>, tpu.core_type = #tpu.core_type<sc_scalar_subcore>, window_params = []} {
    return
  }
}

module attributes {stable_mosaic.version = 11 : i64} {
  func.func @_fused_gnn_kernel(%arg0: i32, %arg1: memref<32xi32, #tpu.memory_space<smem>>, %arg2: memref<32xi32, #tpu.memory_space<smem>>, %arg3: memref<16xi32, #tpu.memory_space<smem>>, %arg4: memref<2x1xf32, #tpu.memory_space<vmem>>, %arg5: memref<16x128xf32, #tpu.memory_space<vmem>>, %arg6: memref<32x128xbf16, #tpu.memory_space<vmem>>, %arg7: memref<32x128xbf16, #tpu.memory_space<vmem>>, %arg8: memref<1x128x128xbf16, #tpu.memory_space<vmem>>, %arg9: memref<1x128x128xbf16, #tpu.memory_space<vmem>>, %arg10: memref<1x128x128xbf16, #tpu.memory_space<vmem>>, %arg11: memref<1x128x128xbf16, #tpu.memory_space<vmem>>, %arg12: memref<1x128x128xbf16, #tpu.memory_space<vmem>>, %arg13: memref<1x3x128xf32, #tpu.memory_space<vmem>>, %arg14: memref<128x128xbf16, #tpu.memory_space<vmem>>, %arg15: memref<128x128xbf16, #tpu.memory_space<vmem>>, %arg16: memref<128x512xbf16, #tpu.memory_space<vmem>>, %arg17: memref<256x128xbf16, #tpu.memory_space<vmem>>, %arg18: memref<1x896xf32, #tpu.memory_space<vmem>>, %arg19: memref<2x128xf32, #tpu.memory_space<vmem>>, %arg20: memref<16x128xf32, #tpu.memory_space<vmem>>, %arg21: memref<32x128xf32, #tpu.memory_space<vmem>>, %arg22: memref<32x128xf32, #tpu.memory_space<vmem>>, %arg23: memref<16x128xf32, #tpu.memory_space<vmem>>, %arg24: memref<16x128xf32, #tpu.memory_space<vmem>>, %arg25: memref<2x128xf32, #tpu.memory_space<vmem>>) attributes {dimension_semantics = [#tpu.dimension_semantics<arbitrary>], iteration_bounds = array<i64: 2>, scalar_prefetch = 3 : i64, scratch_operands = 6 : i64, tpu.core_type = #tpu.core_type<tc>, window_params = [{pipeline_mode = #tpu.pipeline_mode<synchronous>, transform_indices = @transform_0, window_bounds = array<i64: 2, 1>}, {pipeline_mode = #tpu.pipeline_mode<synchronous>, transform_indices = @transform_1, window_bounds = array<i64: 16, 128>}, {pipeline_mode = #tpu.pipeline_mode<synchronous>, transform_indices = @transform_2, window_bounds = array<i64: 32, 128>}, {pipeline_mode = #tpu.pipeline_mode<synchronous>, transform_indices = @transform_3, window_bounds = array<i64: 32, 128>}, {transform_indices = @transform_4, window_bounds = array<i64: 1, 128, 128>}, {transform_indices = @transform_5, window_bounds = array<i64: 1, 128, 128>}, {transform_indices = @transform_6, window_bounds = array<i64: 1, 128, 128>}, {transform_indices = @transform_7, window_bounds = array<i64: 1, 128, 128>}, {transform_indices = @transform_8, window_bounds = array<i64: 1, 128, 128>}, {transform_indices = @transform_9, window_bounds = array<i64: 1, 3, 128>}, {pipeline_mode = #tpu.pipeline_mode<synchronous>, transform_indices = @transform_10, window_bounds = array<i64: 128, 128>}, {pipeline_mode = #tpu.pipeline_mode<synchronous>, transform_indices = @transform_11, window_bounds = array<i64: 128, 128>}, {pipeline_mode = #tpu.pipeline_mode<synchronous>, transform_indices = @transform_12, window_bounds = array<i64: 128, 512>}, {pipeline_mode = #tpu.pipeline_mode<synchronous>, transform_indices = @transform_13, window_bounds = array<i64: 256, 128>}, {pipeline_mode = #tpu.pipeline_mode<synchronous>, transform_indices = @transform_14, window_bounds = array<i64: 1, 896>}, {pipeline_mode = #tpu.pipeline_mode<synchronous>, transform_indices = @transform_15, window_bounds = array<i64: 2, 128>}]} {
    %c0_i32 = arith.constant 0 : i32
    %0 = arith.cmpi eq, %arg0, %c0_i32 : i32
    %1 = arith.extui %0 : i1 to i32
    %c0_i32_0 = arith.constant 0 : i32
    %2 = arith.cmpi ne, %1, %c0_i32_0 : i32
    scf.if %2 {
      %c0_56 = arith.constant 0 : index
      %c0_57 = arith.constant 0 : index
      %69 = vector.load %arg5[%c0_56, %c0_57] : memref<16x128xf32, #tpu.memory_space<vmem>>, vector<16x128xf32>
      %c0_58 = arith.constant 0 : index
      %c0_59 = arith.constant 0 : index
      %70 = vector.load %arg20[%c0_58, %c0_59] : memref<16x128xf32, #tpu.memory_space<vmem>>, vector<16x128xf32>
      tpu.vector_store %arg20[%c0_58, %c0_59], %69 {strides = array<i32>} : memref<16x128xf32, #tpu.memory_space<vmem>>, vector<16x128xf32>,
    } else {
    }
    %c0 = arith.constant 0 : index
    %c0_1 = arith.constant 0 : index
    %3 = vector.load %arg20[%c0, %c0_1] : memref<16x128xf32, #tpu.memory_space<vmem>>, vector<16x128xf32>
    %c0_i32_2 = arith.constant 0 : i32
    %c32_i32 = arith.constant 32 : i32
    %4 = arith.addi %c0_i32_2, %c32_i32 : i32
    %c1_i32 = arith.constant 1 : i32
    scf.for %arg26 = %c0_i32_2 to %4 step %c1_i32  : i32 {
      %c1_i32_56 = arith.constant 1 : i32
      %69 = arith.muli %arg26, %c1_i32_56 : i32
      %c0_i32_57 = arith.constant 0 : i32
      %70 = arith.addi %c0_i32_57, %69 : i32
      %71 = arith.index_cast %70 : i32 to index
      %72 = memref.load %arg1[%71] : memref<32xi32, #tpu.memory_space<smem>>
      %73 = arith.index_cast %72 : i32 to index
      %c0_58 = arith.constant 0 : index
      %74 = vector.load %arg20[%73, %c0_58] : memref<16x128xf32, #tpu.memory_space<vmem>>, vector<1x128xf32>
      %75 = arith.index_cast %70 : i32 to index
      %c0_59 = arith.constant 0 : index
      %76 = vector.load %arg21[%75, %c0_59] : memref<32x128xf32, #tpu.memory_space<vmem>>, vector<1x128xf32>
      tpu.vector_store %arg21[%75, %c0_59], %74 {strides = array<i32>} : memref<32x128xf32, #tpu.memory_space<vmem>>, vector<1x128xf32>,
    }
    %c32_i32_3 = arith.constant 32 : i32
    %c0_4 = arith.constant 0 : index
    %c0_5 = arith.constant 0 : index
    %c0_6 = arith.constant 0 : index
    %5 = vector.load %arg13[%c0_4, %c0_5, %c0_6] : memref<1x3x128xf32, #tpu.memory_space<vmem>>, vector<1x1x128xf32>
    %6 = vector.shape_cast %5 : vector<1x1x128xf32> to vector<1x128xf32>
    %c0_7 = arith.constant 0 : index
    %c1 = arith.constant 1 : index
    %c0_8 = arith.constant 0 : index
    %7 = vector.load %arg13[%c0_7, %c1, %c0_8] : memref<1x3x128xf32, #tpu.memory_space<vmem>>, vector<1x1x128xf32>
    %8 = vector.shape_cast %7 : vector<1x1x128xf32> to vector<1x128xf32>
    %c0_9 = arith.constant 0 : index
    %c2 = arith.constant 2 : index
    %c0_10 = arith.constant 0 : index
    %9 = vector.load %arg13[%c0_9, %c2, %c0_10] : memref<1x3x128xf32, #tpu.memory_space<vmem>>, vector<1x1x128xf32>
    %10 = vector.shape_cast %9 : vector<1x1x128xf32> to vector<1x128xf32>
    %c0_11 = arith.constant 0 : index
    %c0_12 = arith.constant 0 : index
    %11 = vector.load %arg7[%c0_11, %c0_12] : memref<32x128xbf16, #tpu.memory_space<vmem>>, vector<32x128xbf16>
    %c0_13 = arith.constant 0 : index
    %c0_14 = arith.constant 0 : index
    %c0_15 = arith.constant 0 : index
    %12 = vector.load %arg8[%c0_13, %c0_14, %c0_15] : memref<1x128x128xbf16, #tpu.memory_space<vmem>>, vector<1x128x128xbf16>
    %13 = vector.shape_cast %12 : vector<1x128x128xbf16> to vector<128x128xbf16>
    %cst = arith.constant dense<0.000000e+00> : vector<32x128xf32>
    %14 = tpu.matmul %11, %13, %cst {dimension_numbers = #tpu.dot_dimension_numbers<[1], [0], [0], [1], [0, 0, 1, 1], [], []>} : vector<32x128xbf16>, vector<128x128xbf16>, vector<32x128xf32> -> vector<32x128xf32>
    %15 = vector.broadcast %6 : vector<1x128xf32> to vector<32x128xf32>
    %16 = arith.addf %14, %15 : vector<32x128xf32>
    %17 = arith.negf %16 : vector<32x128xf32>
    %18 = math.exp %17 : vector<32x128xf32>
    %cst_16 = arith.constant 1.000000e+00 : f32
    %19 = vector.broadcast %cst_16 : f32 to vector<32x128xf32>
    %20 = arith.addf %19, %18 : vector<32x128xf32>
    %21 = arith.divf %19, %20 : vector<32x128xf32>
    %22 = arith.mulf %16, %21 : vector<32x128xf32>
    %23 = arith.truncf %22 : vector<32x128xf32> to vector<32x128xbf16>
    %c0_17 = arith.constant 0 : index
    %c0_18 = arith.constant 0 : index
    %c0_19 = arith.constant 0 : index
    %24 = vector.load %arg9[%c0_17, %c0_18, %c0_19] : memref<1x128x128xbf16, #tpu.memory_space<vmem>>, vector<1x128x128xbf16>
    %25 = vector.shape_cast %24 : vector<1x128x128xbf16> to vector<128x128xbf16>
    %cst_20 = arith.constant dense<0.000000e+00> : vector<32x128xf32>
    %26 = tpu.matmul %23, %25, %cst_20 {dimension_numbers = #tpu.dot_dimension_numbers<[1], [0], [0], [1], [0, 0, 1, 1], [], []>} : vector<32x128xbf16>, vector<128x128xbf16>, vector<32x128xf32> -> vector<32x128xf32>
    %c0_21 = arith.constant 0 : index
    %c0_22 = arith.constant 0 : index
    %27 = vector.load %arg6[%c0_21, %c0_22] : memref<32x128xbf16, #tpu.memory_space<vmem>>, vector<32x128xbf16>
    %c0_23 = arith.constant 0 : index
    %c0_24 = arith.constant 0 : index
    %c0_25 = arith.constant 0 : index
    %28 = vector.load %arg10[%c0_23, %c0_24, %c0_25] : memref<1x128x128xbf16, #tpu.memory_space<vmem>>, vector<1x128x128xbf16>
    %29 = vector.shape_cast %28 : vector<1x128x128xbf16> to vector<128x128xbf16>
    %cst_26 = arith.constant dense<0.000000e+00> : vector<32x128xf32>
    %30 = tpu.matmul %27, %29, %cst_26 {dimension_numbers = #tpu.dot_dimension_numbers<[1], [0], [0], [1], [0, 0, 1, 1], [], []>} : vector<32x128xbf16>, vector<128x128xbf16>, vector<32x128xf32> -> vector<32x128xf32>
    %31 = arith.addf %26, %30 : vector<32x128xf32>
    %32 = vector.broadcast %8 : vector<1x128xf32> to vector<32x128xf32>
    %33 = arith.addf %31, %32 : vector<32x128xf32>
    %c0_27 = arith.constant 0 : index
    %c0_28 = arith.constant 0 : index
    %34 = vector.load %arg21[%c0_27, %c0_28] : memref<32x128xf32, #tpu.memory_space<vmem>>, vector<32x128xf32>
    %35 = arith.mulf %33, %34 : vector<32x128xf32>
    %c0_29 = arith.constant 0 : index
    %c0_30 = arith.constant 0 : index
    %36 = vector.load %arg22[%c0_29, %c0_30] : memref<32x128xf32, #tpu.memory_space<vmem>>, vector<32x128xf32>
    tpu.vector_store %arg22[%c0_29, %c0_30], %35 {strides = array<i32>} : memref<32x128xf32, #tpu.memory_space<vmem>>, vector<32x128xf32>,
    %cst_31 = arith.constant 0.000000e+00 : f32
    %37 = vector.broadcast %cst_31 : f32 to vector<16x128xf32>
    %c0_32 = arith.constant 0 : index
    %c0_33 = arith.constant 0 : index
    %38 = vector.load %arg23[%c0_32, %c0_33] : memref<16x128xf32, #tpu.memory_space<vmem>>, vector<16x128xf32>
    tpu.vector_store %arg23[%c0_32, %c0_33], %37 {strides = array<i32>} : memref<16x128xf32, #tpu.memory_space<vmem>>, vector<16x128xf32>,
    %c0_i32_34 = arith.constant 0 : i32
    %c32_i32_35 = arith.constant 32 : i32
    %39 = arith.addi %c0_i32_34, %c32_i32_35 : i32
    %c1_i32_36 = arith.constant 1 : i32
    scf.for %arg26 = %c0_i32_34 to %39 step %c1_i32_36  : i32 {
      %c1_i32_56 = arith.constant 1 : i32
      %69 = arith.muli %arg26, %c1_i32_56 : i32
      %c0_i32_57 = arith.constant 0 : i32
      %70 = arith.addi %c0_i32_57, %69 : i32
      %71 = arith.index_cast %70 : i32 to index
      %72 = memref.load %arg2[%71] : memref<32xi32, #tpu.memory_space<smem>>
      %73 = arith.index_cast %72 : i32 to index
      %c0_58 = arith.constant 0 : index
      %74 = vector.load %arg23[%73, %c0_58] : memref<16x128xf32, #tpu.memory_space<vmem>>, vector<1x128xf32>
      %75 = arith.index_cast %70 : i32 to index
      %c0_59 = arith.constant 0 : index
      %76 = vector.load %arg22[%75, %c0_59] : memref<32x128xf32, #tpu.memory_space<vmem>>, vector<1x128xf32>
      %77 = arith.addf %74, %76 : vector<1x128xf32>
      %78 = arith.index_cast %72 : i32 to index
      %c0_60 = arith.constant 0 : index
      %79 = vector.load %arg23[%78, %c0_60] : memref<16x128xf32, #tpu.memory_space<vmem>>, vector<1x128xf32>
      tpu.vector_store %arg23[%78, %c0_60], %77 {strides = array<i32>} : memref<16x128xf32, #tpu.memory_space<vmem>>, vector<1x128xf32>,
    }
    %c32_i32_37 = arith.constant 32 : i32
    %c0_38 = arith.constant 0 : index
    %c0_39 = arith.constant 0 : index
    %40 = vector.load %arg23[%c0_38, %c0_39] : memref<16x128xf32, #tpu.memory_space<vmem>>, vector<16x128xf32>
    %cst_40 = arith.constant 1.000000e-01 : f32
    %41 = vector.broadcast %cst_40 : f32 to vector<16x128xf32>
    %42 = arith.mulf %40, %41 : vector<16x128xf32>
    %43 = arith.truncf %42 : vector<16x128xf32> to vector<16x128xbf16>
    %c0_41 = arith.constant 0 : index
    %c0_42 = arith.constant 0 : index
    %c0_43 = arith.constant 0 : index
    %44 = vector.load %arg11[%c0_41, %c0_42, %c0_43] : memref<1x128x128xbf16, #tpu.memory_space<vmem>>, vector<1x128x128xbf16>
    %45 = vector.shape_cast %44 : vector<1x128x128xbf16> to vector<128x128xbf16>
    %cst_44 = arith.constant dense<0.000000e+00> : vector<16x128xf32>
    %46 = tpu.matmul %43, %45, %cst_44 {dimension_numbers = #tpu.dot_dimension_numbers<[1], [0], [0], [1], [0, 0, 1, 1], [], []>} : vector<16x128xbf16>, vector<128x128xbf16>, vector<16x128xf32> -> vector<16x128xf32>
    %47 = arith.truncf %3 : vector<16x128xf32> to vector<16x128xbf16>
    %c0_45 = arith.constant 0 : index
    %c0_46 = arith.constant 0 : index
    %c0_47 = arith.constant 0 : index
    %48 = vector.load %arg12[%c0_45, %c0_46, %c0_47] : memref<1x128x128xbf16, #tpu.memory_space<vmem>>, vector<1x128x128xbf16>
    %49 = vector.shape_cast %48 : vector<1x128x128xbf16> to vector<128x128xbf16>
    %cst_48 = arith.constant dense<0.000000e+00> : vector<16x128xf32>
    %50 = tpu.matmul %47, %49, %cst_48 {dimension_numbers = #tpu.dot_dimension_numbers<[1], [0], [0], [1], [0, 0, 1, 1], [], []>} : vector<16x128xbf16>, vector<128x128xbf16>, vector<16x128xf32> -> vector<16x128xf32>
    %51 = arith.addf %46, %50 : vector<16x128xf32>
    %52 = vector.broadcast %10 : vector<1x128xf32> to vector<16x128xf32>
    %53 = arith.addf %51, %52 : vector<16x128xf32>
    %54 = arith.negf %53 : vector<16x128xf32>
    %55 = math.exp %54 : vector<16x128xf32>
    %cst_49 = arith.constant 1.000000e+00 : f32
    %56 = vector.broadcast %cst_49 : f32 to vector<16x128xf32>
    %57 = arith.addf %56, %55 : vector<16x128xf32>
    %58 = arith.divf %56, %57 : vector<16x128xf32>
    %59 = arith.mulf %53, %58 : vector<16x128xf32>
    %c0_i32_50 = arith.constant 0 : i32
    %60 = arith.cmpi eq, %arg0, %c0_i32_50 : i32
    %61 = arith.extui %60 : i1 to i32
    %c0_i32_51 = arith.constant 0 : i32
    %62 = arith.cmpi ne, %61, %c0_i32_51 : i32
    scf.if %62 {
      %c0_56 = arith.constant 0 : index
      %c0_57 = arith.constant 0 : index
      %69 = vector.load %arg20[%c0_56, %c0_57] : memref<16x128xf32, #tpu.memory_space<vmem>>, vector<16x128xf32>
      tpu.vector_store %arg20[%c0_56, %c0_57], %59 {strides = array<i32>} : memref<16x128xf32, #tpu.memory_space<vmem>>, vector<16x128xf32>,
    } else {
    }
    %c0_i32_52 = arith.constant 0 : i32
    %63 = arith.cmpi sgt, %arg0, %c0_i32_52 : i32
    %64 = arith.extui %63 : i1 to i32
    %c0_i32_53 = arith.constant 0 : i32
    %65 = arith.cmpi ne, %64, %c0_i32_53 : i32
    scf.if %65 {
      %69 = arith.addf %3, %59 : vector<16x128xf32>
      %c0_56 = arith.constant 0 : index
      %c0_57 = arith.constant 0 : index
      %70 = vector.load %arg20[%c0_56, %c0_57] : memref<16x128xf32, #tpu.memory_space<vmem>>, vector<16x128xf32>
      tpu.vector_store %arg20[%c0_56, %c0_57], %69 {strides = array<i32>} : memref<16x128xf32, #tpu.memory_space<vmem>>, vector<16x128xf32>,
    } else {
    }
    %c1_i32_54 = arith.constant 1 : i32
    %66 = arith.cmpi eq, %arg0, %c1_i32_54 : i32
    %67 = arith.extui %66 : i1 to i32
    %c0_i32_55 = arith.constant 0 : i32
    %68 = arith.cmpi ne, %67, %c0_i32_55 : i32
    scf.if %68 {
      %c0_56 = arith.constant 0 : index
      %c0_57 = arith.constant 0 : index
      %69 = vector.load %arg18[%c0_56, %c0_57] : memref<1x896xf32, #tpu.memory_space<vmem>>, vector<1x128xf32>
      %c0_58 = arith.constant 0 : index
      %c128 = arith.constant 128 : index
      %70 = vector.load %arg18[%c0_58, %c128] : memref<1x896xf32, #tpu.memory_space<vmem>>, vector<1x128xf32>
      %c0_59 = arith.constant 0 : index
      %c256 = arith.constant 256 : index
      %71 = vector.load %arg18[%c0_59, %c256] : memref<1x896xf32, #tpu.memory_space<vmem>>, vector<1x512xf32>
      %c0_60 = arith.constant 0 : index
      %c768 = arith.constant 768 : index
      %72 = vector.load %arg18[%c0_60, %c768] : memref<1x896xf32, #tpu.memory_space<vmem>>, vector<1x128xf32>
      %c0_61 = arith.constant 0 : index
      %c0_62 = arith.constant 0 : index
      %73 = vector.load %arg20[%c0_61, %c0_62] : memref<16x128xf32, #tpu.memory_space<vmem>>, vector<16x128xf32>
      %74 = arith.truncf %73 : vector<16x128xf32> to vector<16x128xbf16>
      %c0_63 = arith.constant 0 : index
      %c0_64 = arith.constant 0 : index
      %75 = vector.load %arg14[%c0_63, %c0_64] : memref<128x128xbf16, #tpu.memory_space<vmem>>, vector<128x128xbf16>
      %cst_65 = arith.constant dense<0.000000e+00> : vector<16x128xf32>
      %76 = tpu.matmul %74, %75, %cst_65 {dimension_numbers = #tpu.dot_dimension_numbers<[1], [0], [0], [1], [0, 0, 1, 1], [], []>} : vector<16x128xbf16>, vector<128x128xbf16>, vector<16x128xf32> -> vector<16x128xf32>
      %77 = vector.broadcast %69 : vector<1x128xf32> to vector<16x128xf32>
      %78 = arith.addf %76, %77 : vector<16x128xf32>
      %79 = arith.negf %78 : vector<16x128xf32>
      %80 = math.exp %79 : vector<16x128xf32>
      %cst_66 = arith.constant 1.000000e+00 : f32
      %81 = vector.broadcast %cst_66 : f32 to vector<16x128xf32>
      %82 = arith.addf %81, %80 : vector<16x128xf32>
      %83 = arith.divf %81, %82 : vector<16x128xf32>
      %84 = arith.mulf %78, %83 : vector<16x128xf32>
      %85 = arith.truncf %84 : vector<16x128xf32> to vector<16x128xbf16>
      %c0_67 = arith.constant 0 : index
      %c0_68 = arith.constant 0 : index
      %86 = vector.load %arg15[%c0_67, %c0_68] : memref<128x128xbf16, #tpu.memory_space<vmem>>, vector<128x128xbf16>
      %cst_69 = arith.constant dense<0.000000e+00> : vector<16x128xf32>
      %87 = tpu.matmul %85, %86, %cst_69 {dimension_numbers = #tpu.dot_dimension_numbers<[1], [0], [0], [1], [0, 0, 1, 1], [], []>} : vector<16x128xbf16>, vector<128x128xbf16>, vector<16x128xf32> -> vector<16x128xf32>
      %88 = vector.broadcast %70 : vector<1x128xf32> to vector<16x128xf32>
      %89 = arith.addf %87, %88 : vector<16x128xf32>
      %c0_70 = arith.constant 0 : index
      %c0_71 = arith.constant 0 : index
      %90 = vector.load %arg24[%c0_70, %c0_71] : memref<16x128xf32, #tpu.memory_space<vmem>>, vector<16x128xf32>
      tpu.vector_store %arg24[%c0_70, %c0_71], %89 {strides = array<i32>} : memref<16x128xf32, #tpu.memory_space<vmem>>, vector<16x128xf32>,
      %cst_72 = arith.constant 0.000000e+00 : f32
      %91 = vector.broadcast %cst_72 : f32 to vector<2x128xf32>
      %c0_73 = arith.constant 0 : index
      %c0_74 = arith.constant 0 : index
      %92 = vector.load %arg25[%c0_73, %c0_74] : memref<2x128xf32, #tpu.memory_space<vmem>>, vector<2x128xf32>
      tpu.vector_store %arg25[%c0_73, %c0_74], %91 {strides = array<i32>} : memref<2x128xf32, #tpu.memory_space<vmem>>, vector<2x128xf32>,
      %c0_i32_75 = arith.constant 0 : i32
      %c16_i32 = arith.constant 16 : i32
      %93 = arith.addi %c0_i32_75, %c16_i32 : i32
      %c1_i32_76 = arith.constant 1 : i32
      scf.for %arg26 = %c0_i32_75 to %93 step %c1_i32_76  : i32 {
        %c1_i32_90 = arith.constant 1 : i32
        %112 = arith.muli %arg26, %c1_i32_90 : i32
        %c0_i32_91 = arith.constant 0 : i32
        %113 = arith.addi %c0_i32_91, %112 : i32
        %114 = arith.index_cast %113 : i32 to index
        %115 = memref.load %arg3[%114] : memref<16xi32, #tpu.memory_space<smem>>
        %116 = arith.index_cast %115 : i32 to index
        %c0_92 = arith.constant 0 : index
        %117 = vector.load %arg25[%116, %c0_92] : memref<2x128xf32, #tpu.memory_space<vmem>>, vector<1x128xf32>
        %118 = arith.index_cast %113 : i32 to index
        %c0_93 = arith.constant 0 : index
        %119 = vector.load %arg24[%118, %c0_93] : memref<16x128xf32, #tpu.memory_space<vmem>>, vector<1x128xf32>
        %120 = arith.addf %117, %119 : vector<1x128xf32>
        %121 = arith.index_cast %115 : i32 to index
        %c0_94 = arith.constant 0 : index
        %122 = vector.load %arg25[%121, %c0_94] : memref<2x128xf32, #tpu.memory_space<vmem>>, vector<1x128xf32>
        tpu.vector_store %arg25[%121, %c0_94], %120 {strides = array<i32>} : memref<2x128xf32, #tpu.memory_space<vmem>>, vector<1x128xf32>,
      }
      %c16_i32_77 = arith.constant 16 : i32
      %c0_78 = arith.constant 0 : index
      %c0_79 = arith.constant 0 : index
      %94 = vector.load %arg25[%c0_78, %c0_79] : memref<2x128xf32, #tpu.memory_space<vmem>>, vector<2x128xf32>
      %c0_80 = arith.constant 0 : index
      %c0_81 = arith.constant 0 : index
      %95 = vector.load %arg4[%c0_80, %c0_81] : memref<2x1xf32, #tpu.memory_space<vmem>>, vector<2x1xf32>
      %96 = vector.broadcast %95 : vector<2x1xf32> to vector<2x128xf32>
      %97 = arith.mulf %94, %96 : vector<2x128xf32>
      %98 = arith.truncf %97 : vector<2x128xf32> to vector<2x128xbf16>
      %c0_82 = arith.constant 0 : index
      %c0_83 = arith.constant 0 : index
      %99 = vector.load %arg16[%c0_82, %c0_83] : memref<128x512xbf16, #tpu.memory_space<vmem>>, vector<128x512xbf16>
      %cst_84 = arith.constant dense<0.000000e+00> : vector<2x512xf32>
      %100 = tpu.matmul %98, %99, %cst_84 {dimension_numbers = #tpu.dot_dimension_numbers<[1], [0], [0], [1], [0, 0, 1, 1], [], []>} : vector<2x128xbf16>, vector<128x512xbf16>, vector<2x512xf32> -> vector<2x512xf32>
      %101 = vector.broadcast %71 : vector<1x512xf32> to vector<2x512xf32>
      %102 = arith.addf %100, %101 : vector<2x512xf32>
      %103 = vector.extract_strided_slice %102 {offsets = [0, 0], sizes = [2, 256], strides = [1, 1]} : vector<2x512xf32> to vector<2x256xf32>
      %104 = vector.extract_strided_slice %102 {offsets = [0, 256], sizes = [2, 256], strides = [1, 1]} : vector<2x512xf32> to vector<2x256xf32>
      %105 = arith.mulf %103, %104 : vector<2x256xf32>
      %106 = arith.truncf %105 : vector<2x256xf32> to vector<2x256xbf16>
      %c0_85 = arith.constant 0 : index
      %c0_86 = arith.constant 0 : index
      %107 = vector.load %arg17[%c0_85, %c0_86] : memref<256x128xbf16, #tpu.memory_space<vmem>>, vector<256x128xbf16>
      %cst_87 = arith.constant dense<0.000000e+00> : vector<2x128xf32>
      %108 = tpu.matmul %106, %107, %cst_87 {dimension_numbers = #tpu.dot_dimension_numbers<[1], [0], [0], [1], [0, 0, 1, 1], [], []>} : vector<2x256xbf16>, vector<256x128xbf16>, vector<2x128xf32> -> vector<2x128xf32>
      %109 = vector.broadcast %72 : vector<1x128xf32> to vector<2x128xf32>
      %110 = arith.addf %108, %109 : vector<2x128xf32>
      %c0_88 = arith.constant 0 : index
      %c0_89 = arith.constant 0 : index
      %111 = vector.load %arg19[%c0_88, %c0_89] : memref<2x128xf32, #tpu.memory_space<vmem>>, vector<2x128xf32>
      tpu.vector_store %arg19[%c0_88, %c0_89], %110 {strides = array<i32>} : memref<2x128xf32, #tpu.memory_space<vmem>>, vector<2x128xf32>,
    } else {
    }
    return
  }
  func.func @transform_0(%arg0: i32, %arg1: memref<32xi32, #tpu.memory_space<smem>>, %arg2: memref<32xi32, #tpu.memory_space<smem>>, %arg3: memref<16xi32, #tpu.memory_space<smem>>) -> (i32, i32) {
    %c0_i32 = arith.constant 0 : i32
    %c0_i32_0 = arith.constant 0 : i32
    %c0_i32_1 = arith.constant 0 : i32
    return %c0_i32, %c0_i32_0 : i32, i32
  }
  func.func @transform_1(%arg0: i32, %arg1: memref<32xi32, #tpu.memory_space<smem>>, %arg2: memref<32xi32, #tpu.memory_space<smem>>, %arg3: memref<16xi32, #tpu.memory_space<smem>>) -> (i32, i32) {
    %c0_i32 = arith.constant 0 : i32
    %c0_i32_0 = arith.constant 0 : i32
    %c0_i32_1 = arith.constant 0 : i32
    return %c0_i32, %c0_i32_0 : i32, i32
  }
  func.func @transform_2(%arg0: i32, %arg1: memref<32xi32, #tpu.memory_space<smem>>, %arg2: memref<32xi32, #tpu.memory_space<smem>>, %arg3: memref<16xi32, #tpu.memory_space<smem>>) -> (i32, i32) {
    %c0_i32 = arith.constant 0 : i32
    %c0_i32_0 = arith.constant 0 : i32
    %c0_i32_1 = arith.constant 0 : i32
    return %c0_i32, %c0_i32_0 : i32, i32
  }
  func.func @transform_3(%arg0: i32, %arg1: memref<32xi32, #tpu.memory_space<smem>>, %arg2: memref<32xi32, #tpu.memory_space<smem>>, %arg3: memref<16xi32, #tpu.memory_space<smem>>) -> (i32, i32) {
    %c0_i32 = arith.constant 0 : i32
    %c0_i32_0 = arith.constant 0 : i32
    %c0_i32_1 = arith.constant 0 : i32
    return %c0_i32, %c0_i32_0 : i32, i32
  }
  func.func @transform_4(%arg0: i32, %arg1: memref<32xi32, #tpu.memory_space<smem>>, %arg2: memref<32xi32, #tpu.memory_space<smem>>, %arg3: memref<16xi32, #tpu.memory_space<smem>>) -> (i32, i32, i32) {
    %c0_i32 = arith.constant 0 : i32
    %c0_i32_0 = arith.constant 0 : i32
    %c0_i32_1 = arith.constant 0 : i32
    return %arg0, %c0_i32, %c0_i32_0 : i32, i32, i32
  }
  func.func @transform_5(%arg0: i32, %arg1: memref<32xi32, #tpu.memory_space<smem>>, %arg2: memref<32xi32, #tpu.memory_space<smem>>, %arg3: memref<16xi32, #tpu.memory_space<smem>>) -> (i32, i32, i32) {
    %c0_i32 = arith.constant 0 : i32
    %c0_i32_0 = arith.constant 0 : i32
    %c0_i32_1 = arith.constant 0 : i32
    return %arg0, %c0_i32, %c0_i32_0 : i32, i32, i32
  }
  func.func @transform_6(%arg0: i32, %arg1: memref<32xi32, #tpu.memory_space<smem>>, %arg2: memref<32xi32, #tpu.memory_space<smem>>, %arg3: memref<16xi32, #tpu.memory_space<smem>>) -> (i32, i32, i32) {
    %c0_i32 = arith.constant 0 : i32
    %c0_i32_0 = arith.constant 0 : i32
    %c0_i32_1 = arith.constant 0 : i32
    return %arg0, %c0_i32, %c0_i32_0 : i32, i32, i32
  }
  func.func @transform_7(%arg0: i32, %arg1: memref<32xi32, #tpu.memory_space<smem>>, %arg2: memref<32xi32, #tpu.memory_space<smem>>, %arg3: memref<16xi32, #tpu.memory_space<smem>>) -> (i32, i32, i32) {
    %c0_i32 = arith.constant 0 : i32
    %c0_i32_0 = arith.constant 0 : i32
    %c0_i32_1 = arith.constant 0 : i32
    return %arg0, %c0_i32, %c0_i32_0 : i32, i32, i32
  }
  func.func @transform_8(%arg0: i32, %arg1: memref<32xi32, #tpu.memory_space<smem>>, %arg2: memref<32xi32, #tpu.memory_space<smem>>, %arg3: memref<16xi32, #tpu.memory_space<smem>>) -> (i32, i32, i32) {
    %c0_i32 = arith.constant 0 : i32
    %c0_i32_0 = arith.constant 0 : i32
    %c0_i32_1 = arith.constant 0 : i32
    return %arg0, %c0_i32, %c0_i32_0 : i32, i32, i32
  }
  func.func @transform_9(%arg0: i32, %arg1: memref<32xi32, #tpu.memory_space<smem>>, %arg2: memref<32xi32, #tpu.memory_space<smem>>, %arg3: memref<16xi32, #tpu.memory_space<smem>>) -> (i32, i32, i32) {
    %c0_i32 = arith.constant 0 : i32
    %c0_i32_0 = arith.constant 0 : i32
    %c0_i32_1 = arith.constant 0 : i32
    return %arg0, %c0_i32, %c0_i32_0 : i32, i32, i32
  }
  func.func @transform_10(%arg0: i32, %arg1: memref<32xi32, #tpu.memory_space<smem>>, %arg2: memref<32xi32, #tpu.memory_space<smem>>, %arg3: memref<16xi32, #tpu.memory_space<smem>>) -> (i32, i32) {
    %c0_i32 = arith.constant 0 : i32
    %c0_i32_0 = arith.constant 0 : i32
    %c0_i32_1 = arith.constant 0 : i32
    return %c0_i32, %c0_i32_0 : i32, i32
  }
  func.func @transform_11(%arg0: i32, %arg1: memref<32xi32, #tpu.memory_space<smem>>, %arg2: memref<32xi32, #tpu.memory_space<smem>>, %arg3: memref<16xi32, #tpu.memory_space<smem>>) -> (i32, i32) {
    %c0_i32 = arith.constant 0 : i32
    %c0_i32_0 = arith.constant 0 : i32
    %c0_i32_1 = arith.constant 0 : i32
    return %c0_i32, %c0_i32_0 : i32, i32
  }
  func.func @transform_12(%arg0: i32, %arg1: memref<32xi32, #tpu.memory_space<smem>>, %arg2: memref<32xi32, #tpu.memory_space<smem>>, %arg3: memref<16xi32, #tpu.memory_space<smem>>) -> (i32, i32) {
    %c0_i32 = arith.constant 0 : i32
    %c0_i32_0 = arith.constant 0 : i32
    %c0_i32_1 = arith.constant 0 : i32
    return %c0_i32, %c0_i32_0 : i32, i32
  }
  func.func @transform_13(%arg0: i32, %arg1: memref<32xi32, #tpu.memory_space<smem>>, %arg2: memref<32xi32, #tpu.memory_space<smem>>, %arg3: memref<16xi32, #tpu.memory_space<smem>>) -> (i32, i32) {
    %c0_i32 = arith.constant 0 : i32
    %c0_i32_0 = arith.constant 0 : i32
    %c0_i32_1 = arith.constant 0 : i32
    return %c0_i32, %c0_i32_0 : i32, i32
  }
  func.func @transform_14(%arg0: i32, %arg1: memref<32xi32, #tpu.memory_space<smem>>, %arg2: memref<32xi32, #tpu.memory_space<smem>>, %arg3: memref<16xi32, #tpu.memory_space<smem>>) -> (i32, i32) {
    %c0_i32 = arith.constant 0 : i32
    %c0_i32_0 = arith.constant 0 : i32
    %c0_i32_1 = arith.constant 0 : i32
    return %c0_i32, %c0_i32_0 : i32, i32
  }
  func.func @transform_15(%arg0: i32, %arg1: memref<32xi32, #tpu.memory_space<smem>>, %arg2: memref<32xi32, #tpu.memory_space<smem>>, %arg3: memref<16xi32, #tpu.memory_space<smem>>) -> (i32, i32) {
    %c0_i32 = arith.constant 0 : i32
    %c0_i32_0 = arith.constant 0 : i32
    %c0_i32_1 = arith.constant 0 : i32
    return %c0_i32, %c0_i32_0 : i32, i32
  }
}

</mosaic_0001>

<llo_original>
// kernel: gnn_head_forward.1
$region0: #{gnn_head_forward.1}
  #allocation0 [shape = 'u32[]', space=smem, size = 0x4, offset = 0x4, fixed_abs, tag = 'smem constant byte address 0x4 - core index']
  #allocation1 [shape = 'u32[144,128]{1,0:T(1,128)}', space=vmem, size = 0x12000, scoped, tag = 'internal scratch']
  #allocation2 [shape = 'f32[16,128]{1,0:T(8,128)}', space=vmem, size = 0x2000, scoped, tag = 'scratch operand']
  #allocation3 [shape = 'f32[32,128]{1,0:T(8,128)}', space=vmem, size = 0x4000, scoped, tag = 'scratch operand']
  #allocation4 [shape = 'f32[32,128]{1,0:T(8,128)}', space=vmem, size = 0x4000, scoped, tag = 'scratch operand']
  #allocation5 [shape = 'f32[16,128]{1,0:T(8,128)}', space=vmem, size = 0x2000, scoped, tag = 'scratch operand']
  #allocation6 [shape = 'f32[16,128]{1,0:T(8,128)}', space=vmem, size = 0x2000, scoped, tag = 'scratch operand']
  #allocation7 [shape = 'f32[2,128]{1,0:T(2,128)}', space=vmem, size = 0x400, scoped, tag = 'scratch operand']
  #allocation8 [shape = 's32[1]{0}', space=sflag, size = 0x4, scoped, tag = 'scoped memory for gnn_head_forward.1']
  #allocation9 [shape = 'u8[512]{0}', space=smem, size = 0x200, scoped, tag = 'prefetched SMEM operand 0']
  #allocation10 [shape = 'u8[512]{0}', space=smem, size = 0x200, scoped, tag = 'prefetched SMEM operand 1']
  #allocation11 [shape = 'u8[512]{0}', space=smem, size = 0x200, scoped, tag = 'prefetched SMEM operand 2']
  %s0 = inlined_call_operand.vmem [shape: s32[32], index: 0, kind: input, shape index: {}]
  %s1 = inlined_call_operand.vmem [shape: s32[32], index: 1, kind: input, shape index: {}]
  %s2 = inlined_call_operand.vmem [shape: s32[16], index: 2, kind: input, shape index: {}]
  %s3 = inlined_call_operand.vmem [shape: f32[2,1], index: 3, kind: input, shape index: {}]
  %s4 = inlined_call_operand.vmem [shape: f32[16,128], index: 4, kind: input, shape index: {}]
  %s5 = inlined_call_operand.vmem [shape: bf16[32,128], index: 5, kind: input, shape index: {}]
  %s6 = inlined_call_operand.vmem [shape: bf16[32,128], index: 6, kind: input, shape index: {}]
  %s7 = inlined_call_operand.vmem [shape: bf16[2,128,128], index: 7, kind: input, shape index: {}]
  %s8 = inlined_call_operand.vmem [shape: bf16[2,128,128], index: 8, kind: input, shape index: {}]
  %s9 = inlined_call_operand.vmem [shape: bf16[2,128,128], index: 9, kind: input, shape index: {}]
  %s10 = inlined_call_operand.vmem [shape: bf16[2,128,128], index: 10, kind: input, shape index: {}]
  %s11 = inlined_call_operand.vmem [shape: bf16[2,128,128], index: 11, kind: input, shape index: {}]
  %s12 = inlined_call_operand.vmem [shape: f32[2,3,128], index: 12, kind: input, shape index: {}]
  %s13 = inlined_call_operand.vmem [shape: bf16[128,128], index: 13, kind: input, shape index: {}]
  %s14 = inlined_call_operand.vmem [shape: bf16[128,128], index: 14, kind: input, shape index: {}]
  %s15 = inlined_call_operand.vmem [shape: bf16[128,512], index: 15, kind: input, shape index: {}]
  %s16 = inlined_call_operand.vmem [shape: bf16[256,128], index: 16, kind: input, shape index: {}]
  %s17 = inlined_call_operand.vmem [shape: f32[1,896], index: 17, kind: input, shape index: {}]
  %s18 = inlined_call_operand.vmem [shape: f32[2,128], index: 18, kind: output, shape index: {}]
  %s19 = sld [smem:[#allocation0]]
  $region130: #{gnn_head_forward.1} parent=0
    _
  %s21 = ssub.s32 1, %s19
  %s22 = scalar_select 0, %s21, %s19
  %s23 = sshll.u32 %s0, 4
  %s24 = int_to_ptr.vmem [resolvable:$true] %s23
  %26 = dma.vmem_to_smem %s24, 16, [#allocation9], [#allocation8]
  %s27 = sshll.u32 %s1, 4
  %s28 = int_to_ptr.vmem [resolvable:$true] %s27
  %30 = dma.vmem_to_smem %s28, 16, [#allocation10], [#allocation8]
  %s31 = sshll.u32 %s2, 4
  %s32 = int_to_ptr.vmem [resolvable:$true] %s31
  %34 = dma.vmem_to_smem %s32, 16, [#allocation11], [#allocation8]
  %35 = dma.done [#allocation8], 48
  %36 = sfence
  loop: start=0, step=1, limit=4
  $region2: #{gnn_head_forward.1} parent=0 // loop_pre_header
    _
  $region3: #{gnn_head_forward.1} parent=0 // loop_header
    %s38 = sphi 0, %s42
    %p39 = scmp.ge.s32.totalorder %s38, 4
    %s46 = sphi 0, %s46
    %s48 = sphi 0, %s46
    %s49 = sphi 0, %s48
    %s63 = sphi 0, %s49
    %s67 = sphi 0, %s67
    %s69 = sphi 0, %s67
    %s70 = sphi 0, %s69
    %s84 = sphi 0, %s70
    %s88 = sphi 0, %s88
    %s90 = sphi 0, %s88
    %s91 = sphi 0, %s90
    %s105 = sphi 0, %s91
    %s109 = sphi 0, %s109
    %s111 = sphi 0, %s109
    %s112 = sphi 0, %s111
    %s126 = sphi 0, %s112
    %s132 = sphi 0, %s134
    %s135 = sphi 0, %s132
    %s136 = sphi 0, %s135
    %s152 = sphi 0, %s136
    %s158 = sphi 0, %s160
    %s161 = sphi 0, %s158
    %s162 = sphi 0, %s161
    %s178 = sphi 0, %s162
    %s184 = sphi 0, %s186
    %s187 = sphi 0, %s184
    %s188 = sphi 0, %s187
    %s204 = sphi 0, %s188
    %s210 = sphi 0, %s212
    %s213 = sphi 0, %s210
    %s214 = sphi 0, %s213
    %s230 = sphi 0, %s214
    %s236 = sphi 0, %s238
    %s239 = sphi 0, %s236
    %s240 = sphi 0, %s239
    %s256 = sphi 0, %s240
    %s262 = sphi 0, %s264
    %s265 = sphi 0, %s262
    %s266 = sphi 0, %s265
    %s282 = sphi 0, %s266
    %s286 = sphi 0, %s286
    %s288 = sphi 0, %s286
    %s289 = sphi 0, %s288
    %s303 = sphi 0, %s289
    %s307 = sphi 0, %s307
    %s309 = sphi 0, %s307
    %s310 = sphi 0, %s309
    %s324 = sphi 0, %s310
    %s328 = sphi 0, %s328
    %s330 = sphi 0, %s328
    %s331 = sphi 0, %s330
    %s345 = sphi 0, %s331
    %s349 = sphi 0, %s349
    %s351 = sphi 0, %s349
    %s352 = sphi 0, %s351
    %s366 = sphi 0, %s352
    %s370 = sphi 0, %s370
    %s372 = sphi 0, %s370
    %s373 = sphi 0, %s372
    %s387 = sphi 0, %s373
    %s391 = sphi 0, %s391
    %s393 = sphi 0, %s391
    %s394 = sphi 0, %s393
    %s408 = sphi 0, %s394
  $region4: #{gnn_head_forward.1} parent=0 // loop_header_branch
    %41 = sbr.rel (%p39) target = $region8
  $region5: #{gnn_head_forward.1} parent=0 // loop_body
    %s43 = ssub.s32 %s38, 1
    %s44 = ssub.s32 %s38, 2
    %s45 = sadd.s32 %s38, 1
    %s47 = sadd.s32 %s46, 1
    %p50 = scmp.eq.s32.totalorder %s38, 1
    %p51 = scmp.ne.s32.totalorder %s46, %s48
    %p52 = scmp.eq.s32.totalorder %s38, 0
    %p53 = por %p51, %p52
    %p54 = scmp.ne.s32.totalorder %s46, %s48
    %p55 = scmp.eq.s32.totalorder %s43, 1
    %p56 = por %p54, %p55
    %p57 = scmp.ne.s32.totalorder %s48, %s49
    %p58 = scmp.eq.s32.totalorder %s43, 0
    %p59 = por %p57, %p58
    %p60 = scmp.ne.s32.totalorder %s48, %s49
    %p61 = scmp.eq.s32.totalorder %s44, 1
    %p62 = por %p60, %p61
    %p64 = scmp.ne.s32.totalorder %s49, %s63
    %p65 = scmp.eq.s32.totalorder %s44, 0
    %p66 = por %p64, %p65
    %s68 = sadd.s32 %s67, 1
    %p71 = scmp.eq.s32.totalorder %s38, 1
    %p72 = scmp.ne.s32.totalorder %s67, %s69
    %p73 = scmp.eq.s32.totalorder %s38, 0
    %p74 = por %p72, %p73
    %p75 = scmp.ne.s32.totalorder %s67, %s69
    %p76 = scmp.eq.s32.totalorder %s43, 1
    %p77 = por %p75, %p76
    %p78 = scmp.ne.s32.totalorder %s69, %s70
    %p79 = scmp.eq.s32.totalorder %s43, 0
    %p80 = por %p78, %p79
    %p81 = scmp.ne.s32.totalorder %s69, %s70
    %p82 = scmp.eq.s32.totalorder %s44, 1
    %p83 = por %p81, %p82
    %p85 = scmp.ne.s32.totalorder %s70, %s84
    %p86 = scmp.eq.s32.totalorder %s44, 0
    %p87 = por %p85, %p86
    %s89 = sadd.s32 %s88, 1
    %p92 = scmp.eq.s32.totalorder %s38, 1
    %p93 = scmp.ne.s32.totalorder %s88, %s90
    %p94 = scmp.eq.s32.totalorder %s38, 0
    %p95 = por %p93, %p94
    %p96 = scmp.ne.s32.totalorder %s88, %s90
    %p97 = scmp.eq.s32.totalorder %s43, 1
    %p98 = por %p96, %p97
    %p99 = scmp.ne.s32.totalorder %s90, %s91
    %p100 = scmp.eq.s32.totalorder %s43, 0
    %p101 = por %p99, %p100
    %p102 = scmp.ne.s32.totalorder %s90, %s91
    %p103 = scmp.eq.s32.totalorder %s44, 1
    %p104 = por %p102, %p103
    %p106 = scmp.ne.s32.totalorder %s91, %s105
    %p107 = scmp.eq.s32.totalorder %s44, 0
    %p108 = por %p106, %p107
    %s110 = sadd.s32 %s109, 1
    %p113 = scmp.eq.s32.totalorder %s38, 1
    %p114 = scmp.ne.s32.totalorder %s109, %s111
    %p115 = scmp.eq.s32.totalorder %s38, 0
    %p116 = por %p114, %p115
    %p117 = scmp.ne.s32.totalorder %s109, %s111
    %p118 = scmp.eq.s32.totalorder %s43, 1
    %p119 = por %p117, %p118
    %p120 = scmp.ne.s32.totalorder %s111, %s112
    %p121 = scmp.eq.s32.totalorder %s43, 0
    %p122 = por %p120, %p121
    %p123 = scmp.ne.s32.totalorder %s111, %s112
    %p124 = scmp.eq.s32.totalorder %s44, 1
    %p125 = por %p123, %p124
    %p127 = scmp.ne.s32.totalorder %s112, %s126
    %p128 = scmp.eq.s32.totalorder %s44, 0
    %p129 = por %p127, %p128
    %s130 = ssub.s32 %s38, %s45
    %p131 = scmp.eq.s32.totalorder %s130, 0
    %s133 = sadd.s32 %s132, 1
    %s134 = scalar_select %p131, %s132, %s133
    %p137 = pneg %p131
    %p138 = scmp.eq.s32.totalorder %s38, 1
    %p139 = por %p137, %p138
    %p140 = scmp.ne.s32.totalorder %s132, %s135
    %p141 = scmp.eq.s32.totalorder %s38, 0
    %p142 = por %p140, %p141
    %p143 = scmp.ne.s32.totalorder %s132, %s135
    %p144 = scmp.eq.s32.totalorder %s43, 1
    %p145 = por %p143, %p144
    %p146 = scmp.ne.s32.totalorder %s135, %s136
    %p147 = scmp.eq.s32.totalorder %s43, 0
    %p148 = por %p146, %p147
    %p149 = scmp.ne.s32.totalorder %s135, %s136
    %p150 = scmp.eq.s32.totalorder %s44, 1
    %p151 = por %p149, %p150
    %p153 = scmp.ne.s32.totalorder %s136, %s152
    %p154 = scmp.eq.s32.totalorder %s44, 0
    %p155 = por %p153, %p154
    %s156 = ssub.s32 %s38, %s45
    %p157 = scmp.eq.s32.totalorder %s156, 0
    %s159 = sadd.s32 %s158, 1
    %s160 = scalar_select %p157, %s158, %s159
    %p163 = pneg %p157
    %p164 = scmp.eq.s32.totalorder %s38, 1
    %p165 = por %p163, %p164
    %p166 = scmp.ne.s32.totalorder %s158, %s161
    %p167 = scmp.eq.s32.totalorder %s38, 0
    %p168 = por %p166, %p167
    %p169 = scmp.ne.s32.totalorder %s158, %s161
    %p170 = scmp.eq.s32.totalorder %s43, 1
    %p171 = por %p169, %p170
    %p172 = scmp.ne.s32.totalorder %s161, %s162
    %p173 = scmp.eq.s32.totalorder %s43, 0
    %p174 = por %p172, %p173
    %p175 = scmp.ne.s32.totalorder %s161, %s162
    %p176 = scmp.eq.s32.totalorder %s44, 1
    %p177 = por %p175, %p176
    %p179 = scmp.ne.s32.totalorder %s162, %s178
    %p180 = scmp.eq.s32.totalorder %s44, 0
    %p181 = por %p179, %p180
    %s182 = ssub.s32 %s38, %s45
    %p183 = scmp.eq.s32.totalorder %s182, 0
    %s185 = sadd.s32 %s184, 1
    %s186 = scalar_select %p183, %s184, %s185
    %p189 = pneg %p183
    %p190 = scmp.eq.s32.totalorder %s38, 1
    %p191 = por %p189, %p190
    %p192 = scmp.ne.s32.totalorder %s184, %s187
    %p193 = scmp.eq.s32.totalorder %s38, 0
    %p194 = por %p192, %p193
    %p195 = scmp.ne.s32.totalorder %s184, %s187
    %p196 = scmp.eq.s32.totalorder %s43, 1
    %p197 = por %p195, %p196
    %p198 = scmp.ne.s32.totalorder %s187, %s188
    %p199 = scmp.eq.s32.totalorder %s43, 0
    %p200 = por %p198, %p199
    %p201 = scmp.ne.s32.totalorder %s187, %s188
    %p202 = scmp.eq.s32.totalorder %s44, 1
    %p203 = por %p201, %p202
    %p205 = scmp.ne.s32.totalorder %s188, %s204
    %p206 = scmp.eq.s32.totalorder %s44, 0
    %p207 = por %p205, %p206
    %s208 = ssub.s32 %s38, %s45
    %p209 = scmp.eq.s32.totalorder %s208, 0
    %s211 = sadd.s32 %s210, 1
    %s212 = scalar_select %p209, %s210, %s211
    %p215 = pneg %p209
    %p216 = scmp.eq.s32.totalorder %s38, 1
    %p217 = por %p215, %p216
    %p218 = scmp.ne.s32.totalorder %s210, %s213
    %p219 = scmp.eq.s32.totalorder %s38, 0
    %p220 = por %p218, %p219
    %p221 = scmp.ne.s32.totalorder %s210, %s213
    %p222 = scmp.eq.s32.totalorder %s43, 1
    %p223 = por %p221, %p222
    %p224 = scmp.ne.s32.totalorder %s213, %s214
    %p225 = scmp.eq.s32.totalorder %s43, 0
    %p226 = por %p224, %p225
    %p227 = scmp.ne.s32.totalorder %s213, %s214
    %p228 = scmp.eq.s32.totalorder %s44, 1
    %p229 = por %p227, %p228
    %p231 = scmp.ne.s32.totalorder %s214, %s230
    %p232 = scmp.eq.s32.totalorder %s44, 0
    %p233 = por %p231, %p232
    %s234 = ssub.s32 %s38, %s45
    %p235 = scmp.eq.s32.totalorder %s234, 0
    %s237 = sadd.s32 %s236, 1
    %s238 = scalar_select %p235, %s236, %s237
    %p241 = pneg %p235
    %p242 = scmp.eq.s32.totalorder %s38, 1
    %p243 = por %p241, %p242
    %p244 = scmp.ne.s32.totalorder %s236, %s239
    %p245 = scmp.eq.s32.totalorder %s38, 0
    %p246 = por %p244, %p245
    %p247 = scmp.ne.s32.totalorder %s236, %s239
    %p248 = scmp.eq.s32.totalorder %s43, 1
    %p249 = por %p247, %p248
    %p250 = scmp.ne.s32.totalorder %s239, %s240
    %p251 = scmp.eq.s32.totalorder %s43, 0
    %p252 = por %p250, %p251
    %p253 = scmp.ne.s32.totalorder %s239, %s240
    %p254 = scmp.eq.s32.totalorder %s44, 1
    %p255 = por %p253, %p254
    %p257 = scmp.ne.s32.totalorder %s240, %s256
    %p258 = scmp.eq.s32.totalorder %s44, 0
    %p259 = por %p257, %p258
    %s260 = ssub.s32 %s38, %s45
    %p261 = scmp.eq.s32.totalorder %s260, 0
    %s263 = sadd.s32 %s262, 1
    %s264 = scalar_select %p261, %s262, %s263
    %p267 = pneg %p261
    %p268 = scmp.eq.s32.totalorder %s38, 1
    %p269 = por %p267, %p268
    %p270 = scmp.ne.s32.totalorder %s262, %s265
    %p271 = scmp.eq.s32.totalorder %s38, 0
    %p272 = por %p270, %p271
    %p273 = scmp.ne.s32.totalorder %s262, %s265
    %p274 = scmp.eq.s32.totalorder %s43, 1
    %p275 = por %p273, %p274
    %p276 = scmp.ne.s32.totalorder %s265, %s266
    %p277 = scmp.eq.s32.totalorder %s43, 0
    %p278 = por %p276, %p277
    %p279 = scmp.ne.s32.totalorder %s265, %s266
    %p280 = scmp.eq.s32.totalorder %s44, 1
    %p281 = por %p279, %p280
    %p283 = scmp.ne.s32.totalorder %s266, %s282
    %p284 = scmp.eq.s32.totalorder %s44, 0
    %p285 = por %p283, %p284
    %s287 = sadd.s32 %s286, 1
    %p290 = scmp.eq.s32.totalorder %s38, 1
    %p291 = scmp.ne.s32.totalorder %s286, %s288
    %p292 = scmp.eq.s32.totalorder %s38, 0
    %p293 = por %p291, %p292
    %p294 = scmp.ne.s32.totalorder %s286, %s288
    %p295 = scmp.eq.s32.totalorder %s43, 1
    %p296 = por %p294, %p295
    %p297 = scmp.ne.s32.totalorder %s288, %s289
    %p298 = scmp.eq.s32.totalorder %s43, 0
    %p299 = por %p297, %p298
    %p300 = scmp.ne.s32.totalorder %s288, %s289
    %p301 = scmp.eq.s32.totalorder %s44, 1
    %p302 = por %p300, %p301
    %p304 = scmp.ne.s32.totalorder %s289, %s303
    %p305 = scmp.eq.s32.totalorder %s44, 0
    %p306 = por %p304, %p305
    %s308 = sadd.s32 %s307, 1
    %p311 = scmp.eq.s32.totalorder %s38, 1
    %p312 = scmp.ne.s32.totalorder %s307, %s309
    %p313 = scmp.eq.s32.totalorder %s38, 0
    %p314 = por %p312, %p313
    %p315 = scmp.ne.s32.totalorder %s307, %s309
    %p316 = scmp.eq.s32.totalorder %s43, 1
    %p317 = por %p315, %p316
    %p318 = scmp.ne.s32.totalorder %s309, %s310
    %p319 = scmp.eq.s32.totalorder %s43, 0
    %p320 = por %p318, %p319
    %p321 = scmp.ne.s32.totalorder %s309, %s310
    %p322 = scmp.eq.s32.totalorder %s44, 1
    %p323 = por %p321, %p322
    %p325 = scmp.ne.s32.totalorder %s310, %s324
    %p326 = scmp.eq.s32.totalorder %s44, 0
    %p327 = por %p325, %p326
    %s329 = sadd.s32 %s328, 1
    %p332 = scmp.eq.s32.totalorder %s38, 1
    %p333 = scmp.ne.s32.totalorder %s328, %s330
    %p334 = scmp.eq.s32.totalorder %s38, 0
    %p335 = por %p333, %p334
    %p336 = scmp.ne.s32.totalorder %s328, %s330
    %p337 = scmp.eq.s32.totalorder %s43, 1
    %p338 = por %p336, %p337
    %p339 = scmp.ne.s32.totalorder %s330, %s331
    %p340 = scmp.eq.s32.totalorder %s43, 0
    %p341 = por %p339, %p340
    %p342 = scmp.ne.s32.totalorder %s330, %s331
    %p343 = scmp.eq.s32.totalorder %s44, 1
    %p344 = por %p342, %p343
    %p346 = scmp.ne.s32.totalorder %s331, %s345
    %p347 = scmp.eq.s32.totalorder %s44, 0
    %p348 = por %p346, %p347
    %s350 = sadd.s32 %s349, 1
    %p353 = scmp.eq.s32.totalorder %s38, 1
    %p354 = scmp.ne.s32.totalorder %s349, %s351
    %p355 = scmp.eq.s32.totalorder %s38, 0
    %p356 = por %p354, %p355
    %p357 = scmp.ne.s32.totalorder %s349, %s351
    %p358 = scmp.eq.s32.totalorder %s43, 1
    %p359 = por %p357, %p358
    %p360 = scmp.ne.s32.totalorder %s351, %s352
    %p361 = scmp.eq.s32.totalorder %s43, 0
    %p362 = por %p360, %p361
    %p363 = scmp.ne.s32.totalorder %s351, %s352
    %p364 = scmp.eq.s32.totalorder %s44, 1
    %p365 = por %p363, %p364
    %p367 = scmp.ne.s32.totalorder %s352, %s366
    %p368 = scmp.eq.s32.totalorder %s44, 0
    %p369 = por %p367, %p368
    %s371 = sadd.s32 %s370, 1
    %p374 = scmp.eq.s32.totalorder %s38, 1
    %p375 = scmp.ne.s32.totalorder %s370, %s372
    %p376 = scmp.eq.s32.totalorder %s38, 0
    %p377 = por %p375, %p376
    %p378 = scmp.ne.s32.totalorder %s370, %s372
    %p379 = scmp.eq.s32.totalorder %s43, 1
    %p380 = por %p378, %p379
    %p381 = scmp.ne.s32.totalorder %s372, %s373
    %p382 = scmp.eq.s32.totalorder %s43, 0
    %p383 = por %p381, %p382
    %p384 = scmp.ne.s32.totalorder %s372, %s373
    %p385 = scmp.eq.s32.totalorder %s44, 1
    %p386 = por %p384, %p385
    %p388 = scmp.ne.s32.totalorder %s373, %s387
    %p389 = scmp.eq.s32.totalorder %s44, 0
    %p390 = por %p388, %p389
    %s392 = sadd.s32 %s391, 1
    %p395 = scmp.eq.s32.totalorder %s38, 1
    %p396 = scmp.ne.s32.totalorder %s391, %s393
    %p397 = scmp.eq.s32.totalorder %s38, 0
    %p398 = por %p396, %p397
    %p399 = scmp.ne.s32.totalorder %s391, %s393
    %p400 = scmp.eq.s32.totalorder %s43, 1
    %p401 = por %p399, %p400
    %p402 = scmp.ne.s32.totalorder %s393, %s394
    %p403 = scmp.eq.s32.totalorder %s43, 0
    %p404 = por %p402, %p403
    %p405 = scmp.ne.s32.totalorder %s393, %s394
    %p406 = scmp.eq.s32.totalorder %s44, 1
    %p407 = por %p405, %p406
    %p409 = scmp.ne.s32.totalorder %s394, %s408
    %p410 = scmp.eq.s32.totalorder %s44, 0
    %p411 = por %p409, %p410
    %p412 = scmp.le.s32.totalorder 1, %s38
    %p413 = scmp.lt.s32.totalorder %s38, 3
    %p414 = pnand %p412, %p413
    %p415 = pneg %p414
    // Predicated region
    $region9: #{gnn_head_forward.1} parent=5 // pred_check
      _
    $region10: #{gnn_head_forward.1} parent=5 // pred_check_branch
      %417 = sbr.rel (%p414) target = $region12
    $region11: #{gnn_head_forward.1} parent=5 // pred_region
      %s418 = ssub.s32 %s38, 1
      // Predicated region
      $region13: #{gnn_head_forward.1} parent=11 // pred_check
        %p419 = pneg %p59
      $region14: #{gnn_head_forward.1} parent=11 // pred_check_branch
        %421 = sbr.rel (%p419) target = $region16
      $region15: #{gnn_head_forward.1} parent=11 // pred_region
        _
      $region16: #{gnn_head_forward.1} parent=11 // pred_fallthru
        _
      // Predicated region
      $region17: #{gnn_head_forward.1} parent=11 // pred_check
        %p422 = pneg %p80
      $region18: #{gnn_head_forward.1} parent=11 // pred_check_branch
        %424 = sbr.rel (%p422) target = $region20
      $region19: #{gnn_head_forward.1} parent=11 // pred_region
        _
      $region20: #{gnn_head_forward.1} parent=11 // pred_fallthru
        _
      // Predicated region
      $region21: #{gnn_head_forward.1} parent=11 // pred_check
        %p425 = pneg %p101
      $region22: #{gnn_head_forward.1} parent=11 // pred_check_branch
        %427 = sbr.rel (%p425) target = $region24
      $region23: #{gnn_head_forward.1} parent=11 // pred_region
        _
      $region24: #{gnn_head_forward.1} parent=11 // pred_fallthru
        _
      // Predicated region
      $region25: #{gnn_head_forward.1} parent=11 // pred_check
        %p428 = pneg %p122
      $region26: #{gnn_head_forward.1} parent=11 // pred_check_branch
        %430 = sbr.rel (%p428) target = $region28
      $region27: #{gnn_head_forward.1} parent=11 // pred_region
        _
      $region28: #{gnn_head_forward.1} parent=11 // pred_fallthru
        _
      // Predicated region
      $region29: #{gnn_head_forward.1} parent=11 // pred_check
        %p431 = pneg %p299
      $region30: #{gnn_head_forward.1} parent=11 // pred_check_branch
        %433 = sbr.rel (%p431) target = $region32
      $region31: #{gnn_head_forward.1} parent=11 // pred_region
        _
      $region32: #{gnn_head_forward.1} parent=11 // pred_fallthru
        _
      // Predicated region
      $region33: #{gnn_head_forward.1} parent=11 // pred_check
        %p434 = pneg %p320
      $region34: #{gnn_head_forward.1} parent=11 // pred_check_branch
        %436 = sbr.rel (%p434) target = $region36
      $region35: #{gnn_head_forward.1} parent=11 // pred_region
        _
      $region36: #{gnn_head_forward.1} parent=11 // pred_fallthru
        _
      // Predicated region
      $region37: #{gnn_head_forward.1} parent=11 // pred_check
        %p437 = pneg %p341
      $region38: #{gnn_head_forward.1} parent=11 // pred_check_branch
        %439 = sbr.rel (%p437) target = $region40
      $region39: #{gnn_head_forward.1} parent=11 // pred_region
        _
      $region40: #{gnn_head_forward.1} parent=11 // pred_fallthru
        _
      // Predicated region
      $region41: #{gnn_head_forward.1} parent=11 // pred_check
        %p440 = pneg %p362
      $region42: #{gnn_head_forward.1} parent=11 // pred_check_branch
        %442 = sbr.rel (%p440) target = $region44
      $region43: #{gnn_head_forward.1} parent=11 // pred_region
        _
      $region44: #{gnn_head_forward.1} parent=11 // pred_fallthru
        _
      // Predicated region
      $region45: #{gnn_head_forward.1} parent=11 // pred_check
        %p443 = pneg %p383
      $region46: #{gnn_head_forward.1} parent=11 // pred_check_branch
        %445 = sbr.rel (%p443) target = $region48
      $region47: #{gnn_head_forward.1} parent=11 // pred_region
        _
      $region48: #{gnn_head_forward.1} parent=11 // pred_fallthru
        _
    $region12: #{gnn_head_forward.1} parent=5 // pred_fallthru
      _
    %p446 = scmp.lt.s32.totalorder %s38, 2
    // Predicated region
    $region49: #{gnn_head_forward.1} parent=5 // pred_check
      %p447 = pneg %p446
    $region50: #{gnn_head_forward.1} parent=5 // pred_check_branch
      %449 = sbr.rel (%p447) target = $region52
    $region51: #{gnn_head_forward.1} parent=5 // pred_region
      // Predicated region
      $region53: #{gnn_head_forward.1} parent=51 // pred_check
        %p450 = pneg %p142
      $region54: #{gnn_head_forward.1} parent=51 // pred_check_branch
        %452 = sbr.rel (%p450) target = $region56
      $region55: #{gnn_head_forward.1} parent=51 // pred_region
        %p453 = scmp.lt.s32.totalorder %s38, 1
        %s454 = scalar_select %p453, %s38, 1
        %s455 = smul.addr %s454, 16
        %s456 = smul.addr %s455, 4
        %s457 = scalar_lea.vmem %s7, %s456
      $region56: #{gnn_head_forward.1} parent=51 // pred_fallthru
        _
      // Predicated region
      $region57: #{gnn_head_forward.1} parent=51 // pred_check
        %p458 = pneg %p168
      $region58: #{gnn_head_forward.1} parent=51 // pred_check_branch
        %460 = sbr.rel (%p458) target = $region60
      $region59: #{gnn_head_forward.1} parent=51 // pred_region
        %p461 = scmp.lt.s32.totalorder %s38, 1
        %s462 = scalar_select %p461, %s38, 1
        %s463 = smul.addr %s462, 16
        %s464 = smul.addr %s463, 4
        %s465 = scalar_lea.vmem %s8, %s464
      $region60: #{gnn_head_forward.1} parent=51 // pred_fallthru
        _
      // Predicated region
      $region61: #{gnn_head_forward.1} parent=51 // pred_check
        %p466 = pneg %p194
      $region62: #{gnn_head_forward.1} parent=51 // pred_check_branch
        %468 = sbr.rel (%p466) target = $region64
      $region63: #{gnn_head_forward.1} parent=51 // pred_region
        %p469 = scmp.lt.s32.totalorder %s38, 1
        %s470 = scalar_select %p469, %s38, 1
        %s471 = smul.addr %s470, 16
        %s472 = smul.addr %s471, 4
        %s473 = scalar_lea.vmem %s9, %s472
      $region64: #{gnn_head_forward.1} parent=51 // pred_fallthru
        _
      // Predicated region
      $region65: #{gnn_head_forward.1} parent=51 // pred_check
        %p474 = pneg %p220
      $region66: #{gnn_head_forward.1} parent=51 // pred_check_branch
        %476 = sbr.rel (%p474) target = $region68
      $region67: #{gnn_head_forward.1} parent=51 // pred_region
        %p477 = scmp.lt.s32.totalorder %s38, 1
        %s478 = scalar_select %p477, %s38, 1
        %s479 = smul.addr %s478, 16
        %s480 = smul.addr %s479, 4
        %s481 = scalar_lea.vmem %s10, %s480
      $region68: #{gnn_head_forward.1} parent=51 // pred_fallthru
        _
      // Predicated region
      $region69: #{gnn_head_forward.1} parent=51 // pred_check
        %p482 = pneg %p246
      $region70: #{gnn_head_forward.1} parent=51 // pred_check_branch
        %484 = sbr.rel (%p482) target = $region72
      $region71: #{gnn_head_forward.1} parent=51 // pred_region
        %p485 = scmp.lt.s32.totalorder %s38, 1
        %s486 = scalar_select %p485, %s38, 1
        %s487 = smul.addr %s486, 16
        %s488 = smul.addr %s487, 4
        %s489 = scalar_lea.vmem %s11, %s488
      $region72: #{gnn_head_forward.1} parent=51 // pred_fallthru
        _
      // Predicated region
      $region73: #{gnn_head_forward.1} parent=51 // pred_check
        %p490 = pneg %p272
      $region74: #{gnn_head_forward.1} parent=51 // pred_check_branch
        %492 = sbr.rel (%p490) target = $region76
      $region75: #{gnn_head_forward.1} parent=51 // pred_region
        %p493 = scmp.lt.s32.totalorder %s38, 1
        %s494 = scalar_select %p493, %s38, 1
        %s495 = smul.addr %s494, 4
        %s496 = scalar_lea.vmem %s12, %s495
      $region76: #{gnn_head_forward.1} parent=51 // pred_fallthru
        _
    $region52: #{gnn_head_forward.1} parent=5 // pred_fallthru
      _
    %p497 = scmp.le.s32.totalorder 1, %s38
    %p498 = scmp.lt.s32.totalorder %s38, 3
    %p499 = pnand %p497, %p498
    %p500 = pneg %p499
    // Predicated region
    $region77: #{gnn_head_forward.1} parent=5 // pred_check
      _
    $region78: #{gnn_head_forward.1} parent=5 // pred_check_branch
      %502 = sbr.rel (%p499) target = $region80
    $region79: #{gnn_head_forward.1} parent=5 // pred_region
      %s503 = ssub.s32 %s38, 1
      %p504 = pneg %p59
      %p505 = pneg %p56
      %p506 = pneg %p80
      %p507 = pneg %p77
      %p508 = pneg %p101
      %p509 = pneg %p98
      %p510 = pneg %p122
      %p511 = pneg %p119
      %p512 = scmp.lt.s32.totalorder %s43, 1
      %s513 = scalar_select %p512, %s43, 1
      %s514 = smul.addr %s513, 16
      %s515 = smul.addr %s514, 4
      %s516 = scalar_lea.vmem %s7, %s515
      %p517 = pneg %p148
      %p518 = pneg %p145
      %p519 = scmp.lt.s32.totalorder %s43, 1
      %s520 = scalar_select %p519, %s43, 1
      %s521 = smul.addr %s520, 16
      %s522 = smul.addr %s521, 4
      %s523 = scalar_lea.vmem %s8, %s522
      %p524 = pneg %p174
      %p525 = pneg %p171
      %p526 = scmp.lt.s32.totalorder %s43, 1
      %s527 = scalar_select %p526, %s43, 1
      %s528 = smul.addr %s527, 16
      %s529 = smul.addr %s528, 4
      %s530 = scalar_lea.vmem %s9, %s529
      %p531 = pneg %p200
      %p532 = pneg %p197
      %p533 = scmp.lt.s32.totalorder %s43, 1
      %s534 = scalar_select %p533, %s43, 1
      %s535 = smul.addr %s534, 16
      %s536 = smul.addr %s535, 4
      %s537 = scalar_lea.vmem %s10, %s536
      %p538 = pneg %p226
      %p539 = pneg %p223
      %p540 = scmp.lt.s32.totalorder %s43, 1
      %s541 = scalar_select %p540, %s43, 1
      %s542 = smul.addr %s541, 16
      %s543 = smul.addr %s542, 4
      %s544 = scalar_lea.vmem %s11, %s543
      %p545 = pneg %p252
      %p546 = pneg %p249
      %p547 = scmp.lt.s32.totalorder %s43, 1
      %s548 = scalar_select %p547, %s43, 1
      %s549 = smul.addr %s548, 4
      %s550 = scalar_lea.vmem %s12, %s549
      %p551 = pneg %p278
      %p552 = pneg %p275
      %p553 = pneg %p299
      %p554 = pneg %p296
      %p555 = pneg %p320
      %p556 = pneg %p317
      %p557 = pneg %p341
      %p558 = pneg %p338
      %p559 = pneg %p362
      %p560 = pneg %p359
      %p561 = pneg %p383
      %p562 = pneg %p380
      %p563 = pneg %p404
      %p564 = pneg %p401
      %p565 = scmp.lt.s32.totalorder %s43, 1
      %s566 = scalar_select %p565, %s43, 1
      %s567 = smul.addr %s566, 16
      %s568 = smul.addr %s567, 4
      %s569 = scalar_lea.vmem %s7, %s568
      %p570 = scmp.lt.s32.totalorder %s43, 1
      %s571 = scalar_select %p570, %s43, 1
      %s572 = smul.addr %s571, 16
      %s573 = smul.addr %s572, 4
      %s574 = scalar_lea.vmem %s8, %s573
      %p575 = scmp.lt.s32.totalorder %s43, 1
      %s576 = scalar_select %p575, %s43, 1
      %s577 = smul.addr %s576, 16
      %s578 = smul.addr %s577, 4
      %s579 = scalar_lea.vmem %s9, %s578
      %p580 = scmp.lt.s32.totalorder %s43, 1
      %s581 = scalar_select %p580, %s43, 1
      %s582 = smul.addr %s581, 16
      %s583 = smul.addr %s582, 4
      %s584 = scalar_lea.vmem %s10, %s583
      %p585 = scmp.lt.s32.totalorder %s43, 1
      %s586 = scalar_select %p585, %s43, 1
      %s587 = smul.addr %s586, 16
      %s588 = smul.addr %s587, 4
      %s589 = scalar_lea.vmem %s11, %s588
      %p590 = scmp.lt.s32.totalorder %s43, 1
      %s591 = scalar_select %p590, %s43, 1
      %s592 = smul.addr %s591, 4
      %s593 = scalar_lea.vmem %s12, %s592
      %p595 = scmp.eq.s32.totalorder %s43, 0
      // Predicated region
      $region81: #{gnn_head_forward.1} parent=79 // pred_check
        %p596 = pneg %p595
      $region82: #{gnn_head_forward.1} parent=79 // pred_check_branch
        %598 = sbr.rel (%p596) target = $region84
      $region83: #{gnn_head_forward.1} parent=79 // pred_region
        %v599 = vld [vmem:[%s4] sm:$0xff]
        %v600 = vld [vmem:[%s4 + $0x8] sm:$0xff]
        %601 = vst [vmem:[#allocation2] sm:$0xff] %v599
        %602 = vst [vmem:[#allocation2 + $0x8] sm:$0xff] %v600
      $region84: #{gnn_head_forward.1} parent=79 // pred_fallthru
        _
      %v603 = vld [vmem:[#allocation2] sm:$0xff]
      %v604 = vld [vmem:[#allocation2 + $0x8] sm:$0xff]
      loop: start=0, step=1, limit=32
      $region85: #{gnn_head_forward.1} parent=79 // loop_pre_header
        _
      $region86: #{gnn_head_forward.1} parent=79 // loop_header
        %s606 = sphi 0, %s610
        %p607 = scmp.ge.s32.totalorder %s606, 32
      $region87: #{gnn_head_forward.1} parent=79 // loop_header_branch
        %609 = sbr.rel (%p607) target = $region91
      $region88: #{gnn_head_forward.1} parent=79 // loop_body
        %s611 = sld [smem:[#allocation9 + %s606]]
        %s612 = scalar_lea.vmem [#allocation2], %s611
        %v613 = vld [vmem:[%s612] sm:$0x1]
        %s614 = scalar_lea.vmem [#allocation3], %s606
        %615 = vst [vmem:[%s614] sm:$0x1] %v613
      $region89: #{gnn_head_forward.1} parent=79 // loop_footer
        %s610 = sadd.s32 1, %s606
      $region90: #{gnn_head_forward.1} parent=79 // loop_footer_branch
        %605 = sbr.rel target = $region86
      $region91: #{gnn_head_forward.1} parent=79 // loop_exit
        _
      %v616 = vld [vmem:[%s593] sm:$0x1]
      %v617 = vld [vmem:[%s593 + $0x1] sm:$0x1]
      %v618 = vld [vmem:[%s593 + $0x2] sm:$0x1]
      %v619 = vld [vmem:[%s6] sm:$0xf]
      %v620 = vld [vmem:[%s6 + $0x4] sm:$0xf]
      %v621 = vld [vmem:[%s6 + $0x8] sm:$0xf]
      %v622 = vld [vmem:[%s6 + $0xc] sm:$0xf]
      %v623 = vld [vmem:[%s569] sm:$0xf]
      %v624 = vld [vmem:[%s569 + $0x4] sm:$0xf]
      %v625 = vld [vmem:[%s569 + $0x8] sm:$0xf]
      %v626 = vld [vmem:[%s569 + $0xc] sm:$0xf]
      %v627 = vld [vmem:[%s569 + $0x10] sm:$0xf]
      %v628 = vld [vmem:[%s569 + $0x14] sm:$0xf]
      %v629 = vld [vmem:[%s569 + $0x18] sm:$0xf]
      %v630 = vld [vmem:[%s569 + $0x1c] sm:$0xf]
      %v631 = vld [vmem:[%s569 + $0x20] sm:$0xf]
      %v632 = vld [vmem:[%s569 + $0x24] sm:$0xf]
      %v633 = vld [vmem:[%s569 + $0x28] sm:$0xf]
      %v634 = vld [vmem:[%s569 + $0x2c] sm:$0xf]
      %v635 = vld [vmem:[%s569 + $0x30] sm:$0xf]
      %v636 = vld [vmem:[%s569 + $0x34] sm:$0xf]
      %v637 = vld [vmem:[%s569 + $0x38] sm:$0xf]
      %v638 = vld [vmem:[%s569 + $0x3c] sm:$0xf]
      %v639 = vlaneseq
      %v640 = vshrl.u32 %v639, 7
      %v641 = vsub.s32 0, %v640
      %v642 = vrot.slane %v616, %v641
      %v647 = vunpack.c.l.b16 %v619
      %v648 = vunpack.c.l.b16 %v620
      %v649 = vunpack.c.l.b16 %v621
      %v650 = vunpack.c.l.b16 %v622
      %v651 = vpack.c.b16 %v648, %v647
      %v652 = vpack.c.b16 %v650, %v649
      %v671 = vunpack.c.l.b16 %v623
      %v672 = vunpack.c.l.b16 %v624
      %v673 = vunpack.c.l.b16 %v625
      %v674 = vunpack.c.l.b16 %v626
      %v675 = vunpack.c.l.b16 %v627
      %v676 = vunpack.c.l.b16 %v628
      %v677 = vunpack.c.l.b16 %v629
      %v678 = vunpack.c.l.b16 %v630
      %v679 = vunpack.c.l.b16 %v631
      %v680 = vunpack.c.l.b16 %v632
      %v681 = vunpack.c.l.b16 %v633
      %v682 = vunpack.c.l.b16 %v634
      %v683 = vunpack.c.l.b16 %v635
      %v684 = vunpack.c.l.b16 %v636
      %v685 = vunpack.c.l.b16 %v637
      %v686 = vunpack.c.l.b16 %v638
      %v687 = vpack.c.b16 %v672, %v671
      %v688 = vpack.c.b16 %v674, %v673
      %v689 = vpack.c.b16 %v676, %v675
      %v690 = vpack.c.b16 %v678, %v677
      %v691 = vpack.c.b16 %v680, %v679
      %v692 = vpack.c.b16 %v682, %v681
      %v693 = vpack.c.b16 %v684, %v683
      %v694 = vpack.c.b16 %v686, %v685
      %703 = vmatprep.subr.bf16.mxu0 0
      %704 = vmatpush1.bf16.msra.mxu0 %v687
      %705 = vmatprep.subr.bf16.mxu0 0
      %706 = vmatpush1.bf16.msra.mxu0 %v688
      %707 = vmatprep.subr.bf16.mxu0 0
      %708 = vmatpush1.bf16.msra.mxu0 %v689
      %709 = vmatprep.subr.bf16.mxu0 0
      %710 = vmatpush1.bf16.msra.mxu0 %v690
      %711 = vmatprep.subr.bf16.mxu0 0
      %712 = vmatpush1.bf16.msra.mxu0 %v691
      %713 = vmatprep.subr.bf16.mxu0 0
      %714 = vmatpush1.bf16.msra.mxu0 %v692
      %715 = vmatprep.subr.bf16.mxu0 0
      %716 = vmatpush1.bf16.msra.mxu0 %v693
      %717 = vmatprep.subr.bf16.mxu0 0
      %718 = vmatpush1.bf16.msra.mxu0 %v694
      %719 = vmatprep.subr.bf16.mxu0 0
      %720 = vmatpush1.bf16.msra.mxu0 0
      %721 = vmatprep.subr.bf16.mxu0 0
      %722 = vmatpush1.bf16.msra.mxu0 0
      %723 = vmatprep.subr.bf16.mxu0 0
      %724 = vmatpush1.bf16.msra.mxu0 0
      %725 = vmatprep.subr.bf16.mxu0 0
      %726 = vmatpush1.bf16.msra.mxu0 0
      %727 = vmatprep.subr.bf16.mxu0 0
      %728 = vmatpush1.bf16.msra.mxu0 0
      %729 = vmatprep.subr.bf16.mxu0 0
      %730 = vmatpush1.bf16.msra.mxu0 0
      %731 = vmatprep.subr.bf16.mxu0 0
      %732 = vmatpush1.bf16.msra.mxu0 0
      %733 = vmatprep.subr.bf16.mxu0 0
      %734 = vmatpush1.bf16.msra.mxu0 0
      %735 = vmatprep.mubr.bf16.mxu0 0
      %736 = vmatmul.mubr.bf16.gmra.mrb[0].mxu0 %v651
      %v737 = vpop.f32.mrb[0].mxu0
      %v738 = vadd.f32 %v642, %v737
      %v739 = vpop.f32.mrb[0].mxu0
      %v740 = vpop.f32.mrb[0].mxu0
      %v741 = vadd.f32 %v642, %v740
      %v742 = vpop.f32.mrb[0].mxu0
      %743 = vmatprep.mubr.bf16.mxu0 0
      %744 = vmatmul.mubr.bf16.gmra.mrb[0].mxu0 %v652
      %v745 = vpop.f32.mrb[0].mxu0
      %v746 = vadd.f32 %v642, %v745
      %v747 = vpop.f32.mrb[0].mxu0
      %v748 = vpop.f32.mrb[0].mxu0
      %v749 = vadd.f32 %v642, %v748
      %v750 = vpop.f32.mrb[0].mxu0
      %751 = vdwg.mxu0
      %v752 = vxor.u32 %v738, 2147483648
      %v753 = vxor.u32 %v741, 2147483648
      %v754 = vxor.u32 %v746, 2147483648
      %v755 = vxor.u32 %v749, 2147483648
      %v756 = vmul.f32 %v752, 1.442695
      %v757 = vpow.pop %v756
      %v758 = vmul.f32 %v753, 1.442695
      %v759 = vpow.pop %v758
      %v760 = vmul.f32 %v754, 1.442695
      %v761 = vpow.pop %v760
      %v762 = vmul.f32 %v755, 1.442695
      %v763 = vpow.pop %v762
      %v764 = vadd.f32 %v757, 1.0
      %v765 = vadd.f32 %v759, 1.0
      %v766 = vadd.f32 %v761, 1.0
      %v767 = vadd.f32 %v763, 1.0
      %v768 = vrcp.pop %v764
      %v769 = vmul.f32 1.0, %v768
      %v770 = vrcp.pop %v765
      %v771 = vmul.f32 1.0, %v770
      %v772 = vrcp.pop %v766
      %v773 = vmul.f32 1.0, %v772
      %v774 = vrcp.pop %v767
      %v775 = vmul.f32 1.0, %v774
      %v776 = vmul.f32 %v738, %v769
      %v777 = vmul.f32 %v741, %v771
      %v778 = vmul.f32 %v746, %v773
      %v779 = vmul.f32 %v749, %v775
      %v780 = vpack.c.bf16 %v777, %v776
      %v781 = vpack.c.bf16 %v779, %v778
      %v782 = vld [vmem:[%s574] sm:$0xf]
      %v783 = vld [vmem:[%s574 + $0x4] sm:$0xf]
      %v784 = vld [vmem:[%s574 + $0x8] sm:$0xf]
      %v785 = vld [vmem:[%s574 + $0xc] sm:$0xf]
      %v786 = vld [vmem:[%s574 + $0x10] sm:$0xf]
      %v787 = vld [vmem:[%s574 + $0x14] sm:$0xf]
      %v788 = vld [vmem:[%s574 + $0x18] sm:$0xf]
      %v789 = vld [vmem:[%s574 + $0x1c] sm:$0xf]
      %v790 = vld [vmem:[%s574 + $0x20] sm:$0xf]
      %v791 = vld [vmem:[%s574 + $0x24] sm:$0xf]
      %v792 = vld [vmem:[%s574 + $0x28] sm:$0xf]
      %v793 = vld [vmem:[%s574 + $0x2c] sm:$0xf]
      %v794 = vld [vmem:[%s574 + $0x30] sm:$0xf]
      %v795 = vld [vmem:[%s574 + $0x34] sm:$0xf]
      %v796 = vld [vmem:[%s574 + $0x38] sm:$0xf]
      %v797 = vld [vmem:[%s574 + $0x3c] sm:$0xf]
      %v798 = vld [vmem:[%s5] sm:$0xf]
      %v799 = vld [vmem:[%s5 + $0x4] sm:$0xf]
      %v800 = vld [vmem:[%s5 + $0x8] sm:$0xf]
      %v801 = vld [vmem:[%s5 + $0xc] sm:$0xf]
      %v802 = vld [vmem:[%s579] sm:$0xf]
      %v803 = vld [vmem:[%s579 + $0x4] sm:$0xf]
      %v804 = vld [vmem:[%s579 + $0x8] sm:$0xf]
      %v805 = vld [vmem:[%s579 + $0xc] sm:$0xf]
      %v806 = vld [vmem:[%s579 + $0x10] sm:$0xf]
      %v807 = vld [vmem:[%s579 + $0x14] sm:$0xf]
      %v808 = vld [vmem:[%s579 + $0x18] sm:$0xf]
      %v809 = vld [vmem:[%s579 + $0x1c] sm:$0xf]
      %v810 = vld [vmem:[%s579 + $0x20] sm:$0xf]
      %v811 = vld [vmem:[%s579 + $0x24] sm:$0xf]
      %v812 = vld [vmem:[%s579 + $0x28] sm:$0xf]
      %v813 = vld [vmem:[%s579 + $0x2c] sm:$0xf]
      %v814 = vld [vmem:[%s579 + $0x30] sm:$0xf]
      %v815 = vld [vmem:[%s579 + $0x34] sm:$0xf]
      %v816 = vld [vmem:[%s579 + $0x38] sm:$0xf]
      %v817 = vld [vmem:[%s579 + $0x3c] sm:$0xf]
      %v822 = vunpack.c.l.b16 %v798
      %v823 = vunpack.c.l.b16 %v799
      %v824 = vunpack.c.l.b16 %v800
      %v825 = vunpack.c.l.b16 %v801
      %v826 = vpack.c.b16 %v823, %v822
      %v827 = vpack.c.b16 %v825, %v824
      %v846 = vunpack.c.l.b16 %v802
      %v847 = vunpack.c.l.b16 %v803
      %v848 = vunpack.c.l.b16 %v804
      %v849 = vunpack.c.l.b16 %v805
      %v850 = vunpack.c.l.b16 %v806
      %v851 = vunpack.c.l.b16 %v807
      %v852 = vunpack.c.l.b16 %v808
      %v853 = vunpack.c.l.b16 %v809
      %v854 = vunpack.c.l.b16 %v810
      %v855 = vunpack.c.l.b16 %v811
      %v856 = vunpack.c.l.b16 %v812
      %v857 = vunpack.c.l.b16 %v813
      %v858 = vunpack.c.l.b16 %v814
      %v859 = vunpack.c.l.b16 %v815
      %v860 = vunpack.c.l.b16 %v816
      %v861 = vunpack.c.l.b16 %v817
      %v862 = vpack.c.b16 %v847, %v846
      %v863 = vpack.c.b16 %v849, %v848
      %v864 = vpack.c.b16 %v851, %v850
      %v865 = vpack.c.b16 %v853, %v852
      %v866 = vpack.c.b16 %v855, %v854
      %v867 = vpack.c.b16 %v857, %v856
      %v868 = vpack.c.b16 %v859, %v858
      %v869 = vpack.c.b16 %v861, %v860
      %878 = vmatprep.subr.bf16.mxu0 0
      %879 = vmatpush1.bf16.msra.mxu0 %v862
      %880 = vmatprep.subr.bf16.mxu0 0
      %881 = vmatpush1.bf16.msra.mxu0 %v863
      %882 = vmatprep.subr.bf16.mxu0 0
      %883 = vmatpush1.bf16.msra.mxu0 %v864
      %884 = vmatprep.subr.bf16.mxu0 0
      %885 = vmatpush1.bf16.msra.mxu0 %v865
      %886 = vmatprep.subr.bf16.mxu0 0
      %887 = vmatpush1.bf16.msra.mxu0 %v866
      %888 = vmatprep.subr.bf16.mxu0 0
      %889 = vmatpush1.bf16.msra.mxu0 %v867
      %890 = vmatprep.subr.bf16.mxu0 0
      %891 = vmatpush1.bf16.msra.mxu0 %v868
      %892 = vmatprep.subr.bf16.mxu0 0
      %893 = vmatpush1.bf16.msra.mxu0 %v869
      %894 = vmatprep.subr.bf16.mxu0 0
      %895 = vmatpush1.bf16.msra.mxu0 0
      %896 = vmatprep.subr.bf16.mxu0 0
      %897 = vmatpush1.bf16.msra.mxu0 0
      %898 = vmatprep.subr.bf16.mxu0 0
      %899 = vmatpush1.bf16.msra.mxu0 0
      %900 = vmatprep.subr.bf16.mxu0 0
      %901 = vmatpush1.bf16.msra.mxu0 0
      %902 = vmatprep.subr.bf16.mxu0 0
      %903 = vmatpush1.bf16.msra.mxu0 0
      %904 = vmatprep.subr.bf16.mxu0 0
      %905 = vmatpush1.bf16.msra.mxu0 0
      %906 = vmatprep.subr.bf16.mxu0 0
      %907 = vmatpush1.bf16.msra.mxu0 0
      %908 = vmatprep.subr.bf16.mxu0 0
      %909 = vmatpush1.bf16.msra.mxu0 0
      %910 = vmatprep.mubr.bf16.mxu0 0
      %911 = vmatmul.mubr.bf16.gmra.mrb[0].mxu0 %v826
      %v912 = vpop.f32.mrb[0].mxu0
      %v913 = vadd.f32 0.0, %v912
      %v914 = vpop.f32.mrb[0].mxu0
      %v915 = vpop.f32.mrb[0].mxu0
      %v916 = vadd.f32 0.0, %v915
      %v917 = vpop.f32.mrb[0].mxu0
      %918 = vmatprep.mubr.bf16.mxu0 0
      %919 = vmatmul.mubr.bf16.gmra.mrb[0].mxu0 %v827
      %v920 = vpop.f32.mrb[0].mxu0
      %v921 = vadd.f32 0.0, %v920
      %v922 = vpop.f32.mrb[0].mxu0
      %v923 = vpop.f32.mrb[0].mxu0
      %v924 = vadd.f32 0.0, %v923
      %v925 = vpop.f32.mrb[0].mxu0
      %926 = vdwg.mxu0
      %v943 = vunpack.c.l.b16 %v782
      %v944 = vunpack.c.l.b16 %v783
      %v945 = vunpack.c.l.b16 %v784
      %v946 = vunpack.c.l.b16 %v785
      %v947 = vunpack.c.l.b16 %v786
      %v948 = vunpack.c.l.b16 %v787
      %v949 = vunpack.c.l.b16 %v788
      %v950 = vunpack.c.l.b16 %v789
      %v951 = vunpack.c.l.b16 %v790
      %v952 = vunpack.c.l.b16 %v791
      %v953 = vunpack.c.l.b16 %v792
      %v954 = vunpack.c.l.b16 %v793
      %v955 = vunpack.c.l.b16 %v794
      %v956 = vunpack.c.l.b16 %v795
      %v957 = vunpack.c.l.b16 %v796
      %v958 = vunpack.c.l.b16 %v797
      %v959 = vpack.c.b16 %v944, %v943
      %v960 = vpack.c.b16 %v946, %v945
      %v961 = vpack.c.b16 %v948, %v947
      %v962 = vpack.c.b16 %v950, %v949
      %v963 = vpack.c.b16 %v952, %v951
      %v964 = vpack.c.b16 %v954, %v953
      %v965 = vpack.c.b16 %v956, %v955
      %v966 = vpack.c.b16 %v958, %v957
      %975 = vmatprep.subr.bf16.mxu0 0
      %976 = vmatpush1.bf16.msra.mxu0 %v959
      %977 = vmatprep.subr.bf16.mxu0 0
      %978 = vmatpush1.bf16.msra.mxu0 %v960
      %979 = vmatprep.subr.bf16.mxu0 0
      %980 = vmatpush1.bf16.msra.mxu0 %v961
      %981 = vmatprep.subr.bf16.mxu0 0
      %982 = vmatpush1.bf16.msra.mxu0 %v962
      %983 = vmatprep.subr.bf16.mxu0 0
      %984 = vmatpush1.bf16.msra.mxu0 %v963
      %985 = vmatprep.subr.bf16.mxu0 0
      %986 = vmatpush1.bf16.msra.mxu0 %v964
      %987 = vmatprep.subr.bf16.mxu0 0
      %988 = vmatpush1.bf16.msra.mxu0 %v965
      %989 = vmatprep.subr.bf16.mxu0 0
      %990 = vmatpush1.bf16.msra.mxu0 %v966
      %991 = vmatprep.subr.bf16.mxu0 0
      %992 = vmatpush1.bf16.msra.mxu0 0
      %993 = vmatprep.subr.bf16.mxu0 0
      %994 = vmatpush1.bf16.msra.mxu0 0
      %995 = vmatprep.subr.bf16.mxu0 0
      %996 = vmatpush1.bf16.msra.mxu0 0
      %997 = vmatprep.subr.bf16.mxu0 0
      %998 = vmatpush1.bf16.msra.mxu0 0
      %999 = vmatprep.subr.bf16.mxu0 0
      %1000 = vmatpush1.bf16.msra.mxu0 0
      %1001 = vmatprep.subr.bf16.mxu0 0
      %1002 = vmatpush1.bf16.msra.mxu0 0
      %1003 = vmatprep.subr.bf16.mxu0 0
      %1004 = vmatpush1.bf16.msra.mxu0 0
      %1005 = vmatprep.subr.bf16.mxu0 0
      %1006 = vmatpush1.bf16.msra.mxu0 0
      %1007 = vmatprep.mubr.bf16.mxu0 0
      %1008 = vmatmul.mubr.bf16.gmra.mrb[0].mxu0 %v780
      %v1009 = vpop.f32.mrb[0].mxu0
      %v1010 = vadd.f32 %v913, %v1009
      %v1011 = vpop.f32.mrb[0].mxu0
      %v1012 = vpop.f32.mrb[0].mxu0
      %v1013 = vadd.f32 %v916, %v1012
      %v1014 = vpop.f32.mrb[0].mxu0
      %1015 = vmatprep.mubr.bf16.mxu0 0
      %1016 = vmatmul.mubr.bf16.gmra.mrb[0].mxu0 %v781
      %v1017 = vpop.f32.mrb[0].mxu0
      %v1018 = vadd.f32 %v921, %v1017
      %v1019 = vpop.f32.mrb[0].mxu0
      %v1020 = vpop.f32.mrb[0].mxu0
      %v1021 = vadd.f32 %v924, %v1020
      %v1022 = vpop.f32.mrb[0].mxu0
      %1023 = vdwg.mxu0
      %v1024 = vlaneseq
      %v1025 = vshrl.u32 %v1024, 7
      %v1026 = vsub.s32 0, %v1025
      %v1027 = vrot.slane %v617, %v1026
      %v1028 = vadd.f32 %v1010, %v1027
      %v1029 = vadd.f32 %v1013, %v1027
      %v1030 = vadd.f32 %v1018, %v1027
      %v1031 = vadd.f32 %v1021, %v1027
      %v1032 = vld [vmem:[#allocation3] sm:$0xff]
      %v1033 = vld [vmem:[#allocation3 + $0x8] sm:$0xff]
      %v1034 = vld [vmem:[#allocation3 + $0x10] sm:$0xff]
      %v1035 = vld [vmem:[#allocation3 + $0x18] sm:$0xff]
      %v1036 = vmul.f32 %v1028, %v1032
      %v1037 = vmul.f32 %v1029, %v1033
      %v1038 = vmul.f32 %v1030, %v1034
      %v1039 = vmul.f32 %v1031, %v1035
      %1040 = vst [vmem:[#allocation4] sm:$0xff] %v1036
      %1041 = vst [vmem:[#allocation4 + $0x8] sm:$0xff] %v1037
      %1042 = vst [vmem:[#allocation4 + $0x10] sm:$0xff] %v1038
      %1043 = vst [vmem:[#allocation4 + $0x18] sm:$0xff] %v1039
      %1044 = vst [vmem:[#allocation5] sm:$0xff] 0.0
      %1045 = vst [vmem:[#allocation5 + $0x8] sm:$0xff] 0.0
      loop: start=0, step=1, limit=32
      $region92: #{gnn_head_forward.1} parent=79 // loop_pre_header
        _
      $region93: #{gnn_head_forward.1} parent=79 // loop_header
        %s1047 = sphi 0, %s1051
        %p1048 = scmp.ge.s32.totalorder %s1047, 32
      $region94: #{gnn_head_forward.1} parent=79 // loop_header_branch
        %1050 = sbr.rel (%p1048) target = $region98
      $region95: #{gnn_head_forward.1} parent=79 // loop_body
        %s1052 = sld [smem:[#allocation10 + %s1047]]
        %s1053 = scalar_lea.vmem [#allocation5], %s1052
        %v1054 = vld [vmem:[%s1053] sm:$0x1]
        %s1055 = scalar_lea.vmem [#allocation4], %s1047
        %v1056 = vld [vmem:[%s1055] sm:$0x1]
        %v1057 = vadd.f32 %v1054, %v1056
        %1058 = vst [vmem:[%s1053] sm:$0x1] %v1057
      $region96: #{gnn_head_forward.1} parent=79 // loop_footer
        %s1051 = sadd.s32 1, %s1047
      $region97: #{gnn_head_forward.1} parent=79 // loop_footer_branch
        %1046 = sbr.rel target = $region93
      $region98: #{gnn_head_forward.1} parent=79 // loop_exit
        _
      %v1059 = vld [vmem:[#allocation5] sm:$0xff]
      %v1060 = vld [vmem:[#allocation5 + $0x8] sm:$0xff]
      %v1061 = vmul.f32 %v1059, 0.1
      %v1062 = vmul.f32 %v1060, 0.1
      %v1063 = vpack.c.bf16 %v1062, %v1061
      %v1064 = vld [vmem:[%s584] sm:$0xf]
      %v1065 = vld [vmem:[%s584 + $0x4] sm:$0xf]
      %v1066 = vld [vmem:[%s584 + $0x8] sm:$0xf]
      %v1067 = vld [vmem:[%s584 + $0xc] sm:$0xf]
      %v1068 = vld [vmem:[%s584 + $0x10] sm:$0xf]
      %v1069 = vld [vmem:[%s584 + $0x14] sm:$0xf]
      %v1070 = vld [vmem:[%s584 + $0x18] sm:$0xf]
      %v1071 = vld [vmem:[%s584 + $0x1c] sm:$0xf]
      %v1072 = vld [vmem:[%s584 + $0x20] sm:$0xf]
      %v1073 = vld [vmem:[%s584 + $0x24] sm:$0xf]
      %v1074 = vld [vmem:[%s584 + $0x28] sm:$0xf]
      %v1075 = vld [vmem:[%s584 + $0x2c] sm:$0xf]
      %v1076 = vld [vmem:[%s584 + $0x30] sm:$0xf]
      %v1077 = vld [vmem:[%s584 + $0x34] sm:$0xf]
      %v1078 = vld [vmem:[%s584 + $0x38] sm:$0xf]
      %v1079 = vld [vmem:[%s584 + $0x3c] sm:$0xf]
      %v1080 = vpack.c.bf16 %v604, %v603
      %v1081 = vld [vmem:[%s589] sm:$0xf]
      %v1082 = vld [vmem:[%s589 + $0x4] sm:$0xf]
      %v1083 = vld [vmem:[%s589 + $0x8] sm:$0xf]
      %v1084 = vld [vmem:[%s589 + $0xc] sm:$0xf]
      %v1085 = vld [vmem:[%s589 + $0x10] sm:$0xf]
      %v1086 = vld [vmem:[%s589 + $0x14] sm:$0xf]
      %v1087 = vld [vmem:[%s589 + $0x18] sm:$0xf]
      %v1088 = vld [vmem:[%s589 + $0x1c] sm:$0xf]
      %v1089 = vld [vmem:[%s589 + $0x20] sm:$0xf]
      %v1090 = vld [vmem:[%s589 + $0x24] sm:$0xf]
      %v1091 = vld [vmem:[%s589 + $0x28] sm:$0xf]
      %v1092 = vld [vmem:[%s589 + $0x2c] sm:$0xf]
      %v1093 = vld [vmem:[%s589 + $0x30] sm:$0xf]
      %v1094 = vld [vmem:[%s589 + $0x34] sm:$0xf]
      %v1095 = vld [vmem:[%s589 + $0x38] sm:$0xf]
      %v1096 = vld [vmem:[%s589 + $0x3c] sm:$0xf]
      %v1113 = vunpack.c.l.b16 %v1081
      %v1114 = vunpack.c.l.b16 %v1082
      %v1115 = vunpack.c.l.b16 %v1083
      %v1116 = vunpack.c.l.b16 %v1084
      %v1117 = vunpack.c.l.b16 %v1085
      %v1118 = vunpack.c.l.b16 %v1086
      %v1119 = vunpack.c.l.b16 %v1087
      %v1120 = vunpack.c.l.b16 %v1088
      %v1121 = vunpack.c.l.b16 %v1089
      %v1122 = vunpack.c.l.b16 %v1090
      %v1123 = vunpack.c.l.b16 %v1091
      %v1124 = vunpack.c.l.b16 %v1092
      %v1125 = vunpack.c.l.b16 %v1093
      %v1126 = vunpack.c.l.b16 %v1094
      %v1127 = vunpack.c.l.b16 %v1095
      %v1128 = vunpack.c.l.b16 %v1096
      %v1129 = vpack.c.b16 %v1114, %v1113
      %v1130 = vpack.c.b16 %v1116, %v1115
      %v1131 = vpack.c.b16 %v1118, %v1117
      %v1132 = vpack.c.b16 %v1120, %v1119
      %v1133 = vpack.c.b16 %v1122, %v1121
      %v1134 = vpack.c.b16 %v1124, %v1123
      %v1135 = vpack.c.b16 %v1126, %v1125
      %v1136 = vpack.c.b16 %v1128, %v1127
      %1145 = vmatprep.subr.bf16.mxu0 0
      %1146 = vmatpush1.bf16.msra.mxu0 %v1129
      %1147 = vmatprep.subr.bf16.mxu0 0
      %1148 = vmatpush1.bf16.msra.mxu0 %v1130
      %1149 = vmatprep.subr.bf16.mxu0 0
      %1150 = vmatpush1.bf16.msra.mxu0 %v1131
      %1151 = vmatprep.subr.bf16.mxu0 0
      %1152 = vmatpush1.bf16.msra.mxu0 %v1132
      %1153 = vmatprep.subr.bf16.mxu0 0
      %1154 = vmatpush1.bf16.msra.mxu0 %v1133
      %1155 = vmatprep.subr.bf16.mxu0 0
      %1156 = vmatpush1.bf16.msra.mxu0 %v1134
      %1157 = vmatprep.subr.bf16.mxu0 0
      %1158 = vmatpush1.bf16.msra.mxu0 %v1135
      %1159 = vmatprep.subr.bf16.mxu0 0
      %1160 = vmatpush1.bf16.msra.mxu0 %v1136
      %1161 = vmatprep.subr.bf16.mxu0 0
      %1162 = vmatpush1.bf16.msra.mxu0 0
      %1163 = vmatprep.subr.bf16.mxu0 0
      %1164 = vmatpush1.bf16.msra.mxu0 0
      %1165 = vmatprep.subr.bf16.mxu0 0
      %1166 = vmatpush1.bf16.msra.mxu0 0
      %1167 = vmatprep.subr.bf16.mxu0 0
      %1168 = vmatpush1.bf16.msra.mxu0 0
      %1169 = vmatprep.subr.bf16.mxu0 0
      %1170 = vmatpush1.bf16.msra.mxu0 0
      %1171 = vmatprep.subr.bf16.mxu0 0
      %1172 = vmatpush1.bf16.msra.mxu0 0
      %1173 = vmatprep.subr.bf16.mxu0 0
      %1174 = vmatpush1.bf16.msra.mxu0 0
      %1175 = vmatprep.subr.bf16.mxu0 0
      %1176 = vmatpush1.bf16.msra.mxu0 0
      %1177 = vmatprep.mubr.bf16.mxu0 0
      %1178 = vmatmul.mubr.bf16.gmra.mrb[0].mxu0 %v1080
      %v1179 = vpop.f32.mrb[0].mxu0
      %v1180 = vadd.f32 0.0, %v1179
      %v1181 = vpop.f32.mrb[0].mxu0
      %v1182 = vpop.f32.mrb[0].mxu0
      %v1183 = vadd.f32 0.0, %v1182
      %v1184 = vpop.f32.mrb[0].mxu0
      %1185 = vdwg.mxu0
      %v1202 = vunpack.c.l.b16 %v1064
      %v1203 = vunpack.c.l.b16 %v1065
      %v1204 = vunpack.c.l.b16 %v1066
      %v1205 = vunpack.c.l.b16 %v1067
      %v1206 = vunpack.c.l.b16 %v1068
      %v1207 = vunpack.c.l.b16 %v1069
      %v1208 = vunpack.c.l.b16 %v1070
      %v1209 = vunpack.c.l.b16 %v1071
      %v1210 = vunpack.c.l.b16 %v1072
      %v1211 = vunpack.c.l.b16 %v1073
      %v1212 = vunpack.c.l.b16 %v1074
      %v1213 = vunpack.c.l.b16 %v1075
      %v1214 = vunpack.c.l.b16 %v1076
      %v1215 = vunpack.c.l.b16 %v1077
      %v1216 = vunpack.c.l.b16 %v1078
      %v1217 = vunpack.c.l.b16 %v1079
      %v1218 = vpack.c.b16 %v1203, %v1202
      %v1219 = vpack.c.b16 %v1205, %v1204
      %v1220 = vpack.c.b16 %v1207, %v1206
      %v1221 = vpack.c.b16 %v1209, %v1208
      %v1222 = vpack.c.b16 %v1211, %v1210
      %v1223 = vpack.c.b16 %v1213, %v1212
      %v1224 = vpack.c.b16 %v1215, %v1214
      %v1225 = vpack.c.b16 %v1217, %v1216
      %1234 = vmatprep.subr.bf16.mxu0 0
      %1235 = vmatpush1.bf16.msra.mxu0 %v1218
      %1236 = vmatprep.subr.bf16.mxu0 0
      %1237 = vmatpush1.bf16.msra.mxu0 %v1219
      %1238 = vmatprep.subr.bf16.mxu0 0
      %1239 = vmatpush1.bf16.msra.mxu0 %v1220
      %1240 = vmatprep.subr.bf16.mxu0 0
      %1241 = vmatpush1.bf16.msra.mxu0 %v1221
      %1242 = vmatprep.subr.bf16.mxu0 0
      %1243 = vmatpush1.bf16.msra.mxu0 %v1222
      %1244 = vmatprep.subr.bf16.mxu0 0
      %1245 = vmatpush1.bf16.msra.mxu0 %v1223
      %1246 = vmatprep.subr.bf16.mxu0 0
      %1247 = vmatpush1.bf16.msra.mxu0 %v1224
      %1248 = vmatprep.subr.bf16.mxu0 0
      %1249 = vmatpush1.bf16.msra.mxu0 %v1225
      %1250 = vmatprep.subr.bf16.mxu0 0
      %1251 = vmatpush1.bf16.msra.mxu0 0
      %1252 = vmatprep.subr.bf16.mxu0 0
      %1253 = vmatpush1.bf16.msra.mxu0 0
      %1254 = vmatprep.subr.bf16.mxu0 0
      %1255 = vmatpush1.bf16.msra.mxu0 0
      %1256 = vmatprep.subr.bf16.mxu0 0
      %1257 = vmatpush1.bf16.msra.mxu0 0
      %1258 = vmatprep.subr.bf16.mxu0 0
      %1259 = vmatpush1.bf16.msra.mxu0 0
      %1260 = vmatprep.subr.bf16.mxu0 0
      %1261 = vmatpush1.bf16.msra.mxu0 0
      %1262 = vmatprep.subr.bf16.mxu0 0
      %1263 = vmatpush1.bf16.msra.mxu0 0
      %1264 = vmatprep.subr.bf16.mxu0 0
      %1265 = vmatpush1.bf16.msra.mxu0 0
      %1266 = vmatprep.mubr.bf16.mxu0 0
      %1267 = vmatmul.mubr.bf16.gmra.mrb[0].mxu0 %v1063
      %v1268 = vpop.f32.mrb[0].mxu0
      %v1269 = vadd.f32 %v1180, %v1268
      %v1270 = vpop.f32.mrb[0].mxu0
      %v1271 = vpop.f32.mrb[0].mxu0
      %v1272 = vadd.f32 %v1183, %v1271
      %v1273 = vpop.f32.mrb[0].mxu0
      %1274 = vdwg.mxu0
      %v1275 = vlaneseq
      %v1276 = vshrl.u32 %v1275, 7
      %v1277 = vsub.s32 0, %v1276
      %v1278 = vrot.slane %v618, %v1277
      %v1279 = vadd.f32 %v1269, %v1278
      %v1280 = vadd.f32 %v1272, %v1278
      %v1281 = vxor.u32 %v1279, 2147483648
      %v1282 = vxor.u32 %v1280, 2147483648
      %v1283 = vmul.f32 %v1281, 1.442695
      %v1284 = vpow.pop %v1283
      %v1285 = vmul.f32 %v1282, 1.442695
      %v1286 = vpow.pop %v1285
      %v1287 = vadd.f32 %v1284, 1.0
      %v1288 = vadd.f32 %v1286, 1.0
      %v1289 = vrcp.pop %v1287
      %v1290 = vmul.f32 1.0, %v1289
      %v1291 = vrcp.pop %v1288
      %v1292 = vmul.f32 1.0, %v1291
      %v1293 = vmul.f32 %v1279, %v1290
      %v1294 = vmul.f32 %v1280, %v1292
      // Predicated region
      $region99: #{gnn_head_forward.1} parent=79 // pred_check
        %p1295 = pneg %p595
      $region100: #{gnn_head_forward.1} parent=79 // pred_check_branch
        %1297 = sbr.rel (%p1295) target = $region102
      $region101: #{gnn_head_forward.1} parent=79 // pred_region
        %1298 = vst [vmem:[#allocation2] sm:$0xff] %v1293
        %1299 = vst [vmem:[#allocation2 + $0x8] sm:$0xff] %v1294
      $region102: #{gnn_head_forward.1} parent=79 // pred_fallthru
        _
      %p1300 = scmp.gt.s32.totalorder %s43, 0
      // Predicated region
      $region103: #{gnn_head_forward.1} parent=79 // pred_check
        %p1301 = pneg %p1300
      $region104: #{gnn_head_forward.1} parent=79 // pred_check_branch
        %1303 = sbr.rel (%p1301) target = $region106
      $region105: #{gnn_head_forward.1} parent=79 // pred_region
        %v1304 = vadd.f32 %v603, %v1293
        %v1305 = vadd.f32 %v604, %v1294
        %1306 = vst [vmem:[#allocation2] sm:$0xff] %v1304
        %1307 = vst [vmem:[#allocation2 + $0x8] sm:$0xff] %v1305
      $region106: #{gnn_head_forward.1} parent=79 // pred_fallthru
        _
      %p1308 = scmp.eq.s32.totalorder %s43, 1
      // Predicated region
      $region107: #{gnn_head_forward.1} parent=79 // pred_check
        %p1309 = pneg %p1308
      $region108: #{gnn_head_forward.1} parent=79 // pred_check_branch
        %1311 = sbr.rel (%p1309) target = $region110
      $region109: #{gnn_head_forward.1} parent=79 // pred_region
        %v1312 = vld [vmem:[%s17] sm:$0x1]
        %v1313 = vld [vmem:[%s17 + $0x1] sm:$0x1]
        %v1314 = vld [vmem:[%s17 + $0x2] sm:$0xf]
        %v1315 = vld [vmem:[%s17 + $0x6] sm:$0x1]
        %v1316 = vld [vmem:[#allocation2] sm:$0xff]
        %v1317 = vld [vmem:[#allocation2 + $0x8] sm:$0xff]
        %v1318 = vpack.c.bf16 %v1317, %v1316
        %v1319 = vld [vmem:[%s13] sm:$0xf]
        %v1320 = vld [vmem:[%s13 + $0x4] sm:$0xf]
        %v1321 = vld [vmem:[%s13 + $0x8] sm:$0xf]
        %v1322 = vld [vmem:[%s13 + $0xc] sm:$0xf]
        %v1323 = vld [vmem:[%s13 + $0x10] sm:$0xf]
        %v1324 = vld [vmem:[%s13 + $0x14] sm:$0xf]
        %v1325 = vld [vmem:[%s13 + $0x18] sm:$0xf]
        %v1326 = vld [vmem:[%s13 + $0x1c] sm:$0xf]
        %v1327 = vld [vmem:[%s13 + $0x20] sm:$0xf]
        %v1328 = vld [vmem:[%s13 + $0x24] sm:$0xf]
        %v1329 = vld [vmem:[%s13 + $0x28] sm:$0xf]
        %v1330 = vld [vmem:[%s13 + $0x2c] sm:$0xf]
        %v1331 = vld [vmem:[%s13 + $0x30] sm:$0xf]
        %v1332 = vld [vmem:[%s13 + $0x34] sm:$0xf]
        %v1333 = vld [vmem:[%s13 + $0x38] sm:$0xf]
        %v1334 = vld [vmem:[%s13 + $0x3c] sm:$0xf]
        %v1336 = vlaneseq
        %v1337 = vshrl.u32 %v1336, 7
        %v1338 = vsub.s32 0, %v1337
        %v1339 = vrot.slane %v1312, %v1338
        %v1357 = vunpack.c.l.b16 %v1319
        %v1358 = vunpack.c.l.b16 %v1320
        %v1359 = vunpack.c.l.b16 %v1321
        %v1360 = vunpack.c.l.b16 %v1322
        %v1361 = vunpack.c.l.b16 %v1323
        %v1362 = vunpack.c.l.b16 %v1324
        %v1363 = vunpack.c.l.b16 %v1325
        %v1364 = vunpack.c.l.b16 %v1326
        %v1365 = vunpack.c.l.b16 %v1327
        %v1366 = vunpack.c.l.b16 %v1328
        %v1367 = vunpack.c.l.b16 %v1329
        %v1368 = vunpack.c.l.b16 %v1330
        %v1369 = vunpack.c.l.b16 %v1331
        %v1370 = vunpack.c.l.b16 %v1332
        %v1371 = vunpack.c.l.b16 %v1333
        %v1372 = vunpack.c.l.b16 %v1334
        %v1373 = vpack.c.b16 %v1358, %v1357
        %v1374 = vpack.c.b16 %v1360, %v1359
        %v1375 = vpack.c.b16 %v1362, %v1361
        %v1376 = vpack.c.b16 %v1364, %v1363
        %v1377 = vpack.c.b16 %v1366, %v1365
        %v1378 = vpack.c.b16 %v1368, %v1367
        %v1379 = vpack.c.b16 %v1370, %v1369
        %v1380 = vpack.c.b16 %v1372, %v1371
        %1389 = vmatprep.subr.bf16.mxu0 0
        %1390 = vmatpush1.bf16.msra.mxu0 %v1373
        %1391 = vmatprep.subr.bf16.mxu0 0
        %1392 = vmatpush1.bf16.msra.mxu0 %v1374
        %1393 = vmatprep.subr.bf16.mxu0 0
        %1394 = vmatpush1.bf16.msra.mxu0 %v1375
        %1395 = vmatprep.subr.bf16.mxu0 0
        %1396 = vmatpush1.bf16.msra.mxu0 %v1376
        %1397 = vmatprep.subr.bf16.mxu0 0
        %1398 = vmatpush1.bf16.msra.mxu0 %v1377
        %1399 = vmatprep.subr.bf16.mxu0 0
        %1400 = vmatpush1.bf16.msra.mxu0 %v1378
        %1401 = vmatprep.subr.bf16.mxu0 0
        %1402 = vmatpush1.bf16.msra.mxu0 %v1379
        %1403 = vmatprep.subr.bf16.mxu0 0
        %1404 = vmatpush1.bf16.msra.mxu0 %v1380
        %1405 = vmatprep.subr.bf16.mxu0 0
        %1406 = vmatpush1.bf16.msra.mxu0 0
        %1407 = vmatprep.subr.bf16.mxu0 0
        %1408 = vmatpush1.bf16.msra.mxu0 0
        %1409 = vmatprep.subr.bf16.mxu0 0
        %1410 = vmatpush1.bf16.msra.mxu0 0
        %1411 = vmatprep.subr.bf16.mxu0 0
        %1412 = vmatpush1.bf16.msra.mxu0 0
        %1413 = vmatprep.subr.bf16.mxu0 0
        %1414 = vmatpush1.bf16.msra.mxu0 0
        %1415 = vmatprep.subr.bf16.mxu0 0
        %1416 = vmatpush1.bf16.msra.mxu0 0
        %1417 = vmatprep.subr.bf16.mxu0 0
        %1418 = vmatpush1.bf16.msra.mxu0 0
        %1419 = vmatprep.subr.bf16.mxu0 0
        %1420 = vmatpush1.bf16.msra.mxu0 0
        %1421 = vmatprep.mubr.bf16.mxu0 0
        %1422 = vmatmul.mubr.bf16.gmra.mrb[0].mxu0 %v1318
        %v1423 = vpop.f32.mrb[0].mxu0
        %v1424 = vadd.f32 %v1339, %v1423
        %v1425 = vpop.f32.mrb[0].mxu0
        %v1426 = vpop.f32.mrb[0].mxu0
        %v1427 = vadd.f32 %v1339, %v1426
        %v1428 = vpop.f32.mrb[0].mxu0
        %1429 = vdwg.mxu0
        %v1430 = vxor.u32 %v1424, 2147483648
        %v1431 = vxor.u32 %v1427, 2147483648
        %v1432 = vmul.f32 %v1430, 1.442695
        %v1433 = vpow.pop %v1432
        %v1434 = vmul.f32 %v1431, 1.442695
        %v1435 = vpow.pop %v1434
        %v1436 = vadd.f32 %v1433, 1.0
        %v1437 = vadd.f32 %v1435, 1.0
        %v1438 = vrcp.pop %v1436
        %v1439 = vmul.f32 1.0, %v1438
        %v1440 = vrcp.pop %v1437
        %v1441 = vmul.f32 1.0, %v1440
        %v1442 = vmul.f32 %v1424, %v1439
        %v1443 = vmul.f32 %v1427, %v1441
        %v1444 = vpack.c.bf16 %v1443, %v1442
        %v1445 = vld [vmem:[%s14] sm:$0xf]
        %v1446 = vld [vmem:[%s14 + $0x4] sm:$0xf]
        %v1447 = vld [vmem:[%s14 + $0x8] sm:$0xf]
        %v1448 = vld [vmem:[%s14 + $0xc] sm:$0xf]
        %v1449 = vld [vmem:[%s14 + $0x10] sm:$0xf]
        %v1450 = vld [vmem:[%s14 + $0x14] sm:$0xf]
        %v1451 = vld [vmem:[%s14 + $0x18] sm:$0xf]
        %v1452 = vld [vmem:[%s14 + $0x1c] sm:$0xf]
        %v1453 = vld [vmem:[%s14 + $0x20] sm:$0xf]
        %v1454 = vld [vmem:[%s14 + $0x24] sm:$0xf]
        %v1455 = vld [vmem:[%s14 + $0x28] sm:$0xf]
        %v1456 = vld [vmem:[%s14 + $0x2c] sm:$0xf]
        %v1457 = vld [vmem:[%s14 + $0x30] sm:$0xf]
        %v1458 = vld [vmem:[%s14 + $0x34] sm:$0xf]
        %v1459 = vld [vmem:[%s14 + $0x38] sm:$0xf]
        %v1460 = vld [vmem:[%s14 + $0x3c] sm:$0xf]
        %v1462 = vlaneseq
        %v1463 = vshrl.u32 %v1462, 7
        %v1464 = vsub.s32 0, %v1463
        %v1465 = vrot.slane %v1313, %v1464
        %v1483 = vunpack.c.l.b16 %v1445
        %v1484 = vunpack.c.l.b16 %v1446
        %v1485 = vunpack.c.l.b16 %v1447
        %v1486 = vunpack.c.l.b16 %v1448
        %v1487 = vunpack.c.l.b16 %v1449
        %v1488 = vunpack.c.l.b16 %v1450
        %v1489 = vunpack.c.l.b16 %v1451
        %v1490 = vunpack.c.l.b16 %v1452
        %v1491 = vunpack.c.l.b16 %v1453
        %v1492 = vunpack.c.l.b16 %v1454
        %v1493 = vunpack.c.l.b16 %v1455
        %v1494 = vunpack.c.l.b16 %v1456
        %v1495 = vunpack.c.l.b16 %v1457
        %v1496 = vunpack.c.l.b16 %v1458
        %v1497 = vunpack.c.l.b16 %v1459
        %v1498 = vunpack.c.l.b16 %v1460
        %v1499 = vpack.c.b16 %v1484, %v1483
        %v1500 = vpack.c.b16 %v1486, %v1485
        %v1501 = vpack.c.b16 %v1488, %v1487
        %v1502 = vpack.c.b16 %v1490, %v1489
        %v1503 = vpack.c.b16 %v1492, %v1491
        %v1504 = vpack.c.b16 %v1494, %v1493
        %v1505 = vpack.c.b16 %v1496, %v1495
        %v1506 = vpack.c.b16 %v1498, %v1497
        %1515 = vmatprep.subr.bf16.mxu0 0
        %1516 = vmatpush1.bf16.msra.mxu0 %v1499
        %1517 = vmatprep.subr.bf16.mxu0 0
        %1518 = vmatpush1.bf16.msra.mxu0 %v1500
        %1519 = vmatprep.subr.bf16.mxu0 0
        %1520 = vmatpush1.bf16.msra.mxu0 %v1501
        %1521 = vmatprep.subr.bf16.mxu0 0
        %1522 = vmatpush1.bf16.msra.mxu0 %v1502
        %1523 = vmatprep.subr.bf16.mxu0 0
        %1524 = vmatpush1.bf16.msra.mxu0 %v1503
        %1525 = vmatprep.subr.bf16.mxu0 0
        %1526 = vmatpush1.bf16.msra.mxu0 %v1504
        %1527 = vmatprep.subr.bf16.mxu0 0
        %1528 = vmatpush1.bf16.msra.mxu0 %v1505
        %1529 = vmatprep.subr.bf16.mxu0 0
        %1530 = vmatpush1.bf16.msra.mxu0 %v1506
        %1531 = vmatprep.subr.bf16.mxu0 0
        %1532 = vmatpush1.bf16.msra.mxu0 0
        %1533 = vmatprep.subr.bf16.mxu0 0
        %1534 = vmatpush1.bf16.msra.mxu0 0
        %1535 = vmatprep.subr.bf16.mxu0 0
        %1536 = vmatpush1.bf16.msra.mxu0 0
        %1537 = vmatprep.subr.bf16.mxu0 0
        %1538 = vmatpush1.bf16.msra.mxu0 0
        %1539 = vmatprep.subr.bf16.mxu0 0
        %1540 = vmatpush1.bf16.msra.mxu0 0
        %1541 = vmatprep.subr.bf16.mxu0 0
        %1542 = vmatpush1.bf16.msra.mxu0 0
        %1543 = vmatprep.subr.bf16.mxu0 0
        %1544 = vmatpush1.bf16.msra.mxu0 0
        %1545 = vmatprep.subr.bf16.mxu0 0
        %1546 = vmatpush1.bf16.msra.mxu0 0
        %1547 = vmatprep.mubr.bf16.mxu0 0
        %1548 = vmatmul.mubr.bf16.gmra.mrb[0].mxu0 %v1444
        %v1549 = vpop.f32.mrb[0].mxu0
        %v1550 = vadd.f32 %v1465, %v1549
        %v1551 = vpop.f32.mrb[0].mxu0
        %v1552 = vpop.f32.mrb[0].mxu0
        %v1553 = vadd.f32 %v1465, %v1552
        %v1554 = vpop.f32.mrb[0].mxu0
        %1555 = vdwg.mxu0
        %1556 = vst [vmem:[#allocation6] sm:$0xff] %v1550
        %1557 = vst [vmem:[#allocation6 + $0x8] sm:$0xff] %v1553
        %1558 = vst [vmem:[#allocation7] sm:$0x3] 0.0
        loop: start=0, step=1, limit=16
        $region111: #{gnn_head_forward.1} parent=109 // loop_pre_header
          _
        $region112: #{gnn_head_forward.1} parent=109 // loop_header
          %s1560 = sphi 0, %s1564
          %p1561 = scmp.ge.s32.totalorder %s1560, 16
        $region113: #{gnn_head_forward.1} parent=109 // loop_header_branch
          %1563 = sbr.rel (%p1561) target = $region117
        $region114: #{gnn_head_forward.1} parent=109 // loop_body
          %s1565 = sld [smem:[#allocation11 + %s1560]]
          %s1566 = scalar_lea.vmem [#allocation7], %s1565
          %v1567 = vld [vmem:[%s1566] sm:$0x1]
          %s1568 = scalar_lea.vmem [#allocation6], %s1560
          %v1569 = vld [vmem:[%s1568] sm:$0x1]
          %v1570 = vadd.f32 %v1567, %v1569
          %1571 = vst [vmem:[%s1566] sm:$0x1] %v1570
        $region115: #{gnn_head_forward.1} parent=109 // loop_footer
          %s1564 = sadd.s32 1, %s1560
        $region116: #{gnn_head_forward.1} parent=109 // loop_footer_branch
          %1559 = sbr.rel target = $region112
        $region117: #{gnn_head_forward.1} parent=109 // loop_exit
          _
        %v1572 = vld [vmem:[#allocation7] sm:$0x3]
        %v1573 = vld [vmem:[%s3] sm:$0x3]
        %1575 = vset.pattern.permute.xlu0 0
        %1576 = vperm.xlu0 %1575, %v1573
        %v1577 = vpop.permute.xlu0 %1576
        %v1579 = vmul.f32 %v1572, %v1577
        %v1580 = vpack.c.bf16 %v1579, %v1579
        %v1581 = vld [vmem:[%s15] sm:$0xff]
        %v1582 = vld [vmem:[%s15 + $0x8] sm:$0xff]
        %v1583 = vld [vmem:[%s15 + $0x10] sm:$0xff]
        %v1584 = vld [vmem:[%s15 + $0x18] sm:$0xff]
        %v1585 = vld [vmem:[%s15 + $0x20] sm:$0xff]
        %v1586 = vld [vmem:[%s15 + $0x28] sm:$0xff]
        %v1587 = vld [vmem:[%s15 + $0x30] sm:$0xff]
        %v1588 = vld [vmem:[%s15 + $0x38] sm:$0xff]
        %v1589 = vld [vmem:[%s15 + $0x40] sm:$0xff]
        %v1590 = vld [vmem:[%s15 + $0x48] sm:$0xff]
        %v1591 = vld [vmem:[%s15 + $0x50] sm:$0xff]
        %v1592 = vld [vmem:[%s15 + $0x58] sm:$0xff]
        %v1593 = vld [vmem:[%s15 + $0x60] sm:$0xff]
        %v1594 = vld [vmem:[%s15 + $0x68] sm:$0xff]
        %v1595 = vld [vmem:[%s15 + $0x70] sm:$0xff]
        %v1596 = vld [vmem:[%s15 + $0x78] sm:$0xff]
        %v1597 = vld [vmem:[%s15 + $0x80] sm:$0xff]
        %v1598 = vld [vmem:[%s15 + $0x88] sm:$0xff]
        %v1599 = vld [vmem:[%s15 + $0x90] sm:$0xff]
        %v1600 = vld [vmem:[%s15 + $0x98] sm:$0xff]
        %v1601 = vld [vmem:[%s15 + $0xa0] sm:$0xff]
        %v1602 = vld [vmem:[%s15 + $0xa8] sm:$0xff]
        %v1603 = vld [vmem:[%s15 + $0xb0] sm:$0xff]
        %v1604 = vld [vmem:[%s15 + $0xb8] sm:$0xff]
        %v1605 = vld [vmem:[%s15 + $0xc0] sm:$0xff]
        %v1606 = vld [vmem:[%s15 + $0xc8] sm:$0xff]
        %v1607 = vld [vmem:[%s15 + $0xd0] sm:$0xff]
        %v1608 = vld [vmem:[%s15 + $0xd8] sm:$0xff]
        %v1609 = vld [vmem:[%s15 + $0xe0] sm:$0xff]
        %v1610 = vld [vmem:[%s15 + $0xe8] sm:$0xff]
        %v1611 = vld [vmem:[%s15 + $0xf0] sm:$0xff]
        %v1612 = vld [vmem:[%s15 + $0xf8] sm:$0xff]
        %v1614 = vlaneseq
        %v1615 = vshrl.u32 %v1614, 7
        %v1616 = vsub.s32 0, %v1615
        %v1617 = vrot.slane %v1314, %v1616
        %v1618 = vlaneseq
        %v1619 = vshrl.u32 %v1618, 7
        %v1620 = vsub.s32 1, %v1619
        %v1621 = vrot.slane %v1314, %v1620
        %v1622 = vlaneseq
        %v1623 = vshrl.u32 %v1622, 7
        %v1624 = vsub.s32 2, %v1623
        %v1625 = vrot.slane %v1314, %v1624
        %v1626 = vlaneseq
        %v1627 = vshrl.u32 %v1626, 7
        %v1628 = vsub.s32 3, %v1627
        %v1629 = vrot.slane %v1314, %v1628
        %v1666 = vunpack.c.l.b16 %v1581
        %v1667 = vunpack.c.h.b16 %v1581
        %v1668 = vunpack.c.l.b16 %v1582
        %v1669 = vunpack.c.h.b16 %v1582
        %v1670 = vunpack.c.l.b16 %v1583
        %v1671 = vunpack.c.h.b16 %v1583
        %v1672 = vunpack.c.l.b16 %v1584
        %v1673 = vunpack.c.h.b16 %v1584
        %v1674 = vunpack.c.l.b16 %v1585
        %v1675 = vunpack.c.h.b16 %v1585
        %v1676 = vunpack.c.l.b16 %v1586
        %v1677 = vunpack.c.h.b16 %v1586
        %v1678 = vunpack.c.l.b16 %v1587
        %v1679 = vunpack.c.h.b16 %v1587
        %v1680 = vunpack.c.l.b16 %v1588
        %v1681 = vunpack.c.h.b16 %v1588
        %v1682 = vunpack.c.l.b16 %v1589
        %v1683 = vunpack.c.h.b16 %v1589
        %v1684 = vunpack.c.l.b16 %v1590
        %v1685 = vunpack.c.h.b16 %v1590
        %v1686 = vunpack.c.l.b16 %v1591
        %v1687 = vunpack.c.h.b16 %v1591
        %v1688 = vunpack.c.l.b16 %v1592
        %v1689 = vunpack.c.h.b16 %v1592
        %v1690 = vunpack.c.l.b16 %v1593
        %v1691 = vunpack.c.h.b16 %v1593
        %v1692 = vunpack.c.l.b16 %v1594
        %v1693 = vunpack.c.h.b16 %v1594
        %v1694 = vunpack.c.l.b16 %v1595
        %v1695 = vunpack.c.h.b16 %v1595
        %v1696 = vunpack.c.l.b16 %v1596
        %v1697 = vunpack.c.h.b16 %v1596
        %v1698 = vunpack.c.l.b16 %v1597
        %v1699 = vunpack.c.h.b16 %v1597
        %v1700 = vunpack.c.l.b16 %v1598
        %v1701 = vunpack.c.h.b16 %v1598
        %v1702 = vunpack.c.l.b16 %v1599
        %v1703 = vunpack.c.h.b16 %v1599
        %v1704 = vunpack.c.l.b16 %v1600
        %v1705 = vunpack.c.h.b16 %v1600
        %v1706 = vunpack.c.l.b16 %v1601
        %v1707 = vunpack.c.h.b16 %v1601
        %v1708 = vunpack.c.l.b16 %v1602
        %v1709 = vunpack.c.h.b16 %v1602
        %v1710 = vunpack.c.l.b16 %v1603
        %v1711 = vunpack.c.h.b16 %v1603
        %v1712 = vunpack.c.l.b16 %v1604
        %v1713 = vunpack.c.h.b16 %v1604
        %v1714 = vunpack.c.l.b16 %v1605
        %v1715 = vunpack.c.h.b16 %v1605
        %v1716 = vunpack.c.l.b16 %v1606
        %v1717 = vunpack.c.h.b16 %v1606
        %v1718 = vunpack.c.l.b16 %v1607
        %v1719 = vunpack.c.h.b16 %v1607
        %v1720 = vunpack.c.l.b16 %v1608
        %v1721 = vunpack.c.h.b16 %v1608
        %v1722 = vunpack.c.l.b16 %v1609
        %v1723 = vunpack.c.h.b16 %v1609
        %v1724 = vunpack.c.l.b16 %v1610
        %v1725 = vunpack.c.h.b16 %v1610
        %v1726 = vunpack.c.l.b16 %v1611
        %v1727 = vunpack.c.h.b16 %v1611
        %v1728 = vunpack.c.l.b16 %v1612
        %v1729 = vunpack.c.h.b16 %v1612
        %v1730 = vpack.c.b16 %v1670, %v1666
        %v1731 = vpack.c.b16 %v1671, %v1667
        %v1732 = vpack.c.b16 %v1672, %v1668
        %v1733 = vpack.c.b16 %v1673, %v1669
        %v1734 = vpack.c.b16 %v1678, %v1674
        %v1735 = vpack.c.b16 %v1679, %v1675
        %v1736 = vpack.c.b16 %v1680, %v1676
        %v1737 = vpack.c.b16 %v1681, %v1677
        %v1738 = vpack.c.b16 %v1686, %v1682
        %v1739 = vpack.c.b16 %v1687, %v1683
        %v1740 = vpack.c.b16 %v1688, %v1684
        %v1741 = vpack.c.b16 %v1689, %v1685
        %v1742 = vpack.c.b16 %v1694, %v1690
        %v1743 = vpack.c.b16 %v1695, %v1691
        %v1744 = vpack.c.b16 %v1696, %v1692
        %v1745 = vpack.c.b16 %v1697, %v1693
        %v1746 = vpack.c.b16 %v1702, %v1698
        %v1747 = vpack.c.b16 %v1703, %v1699
        %v1748 = vpack.c.b16 %v1704, %v1700
        %v1749 = vpack.c.b16 %v1705, %v1701
        %v1750 = vpack.c.b16 %v1710, %v1706
        %v1751 = vpack.c.b16 %v1711, %v1707
        %v1752 = vpack.c.b16 %v1712, %v1708
        %v1753 = vpack.c.b16 %v1713, %v1709
        %v1754 = vpack.c.b16 %v1718, %v1714
        %v1755 = vpack.c.b16 %v1719, %v1715
        %v1756 = vpack.c.b16 %v1720, %v1716
        %v1757 = vpack.c.b16 %v1721, %v1717
        %v1758 = vpack.c.b16 %v1726, %v1722
        %v1759 = vpack.c.b16 %v1727, %v1723
        %v1760 = vpack.c.b16 %v1728, %v1724
        %v1761 = vpack.c.b16 %v1729, %v1725
        %1794 = vmatprep.subr.bf16.mxu0 %v1731
        %1795 = vmatpush1.bf16.msra.mxu0 %v1730
        %1796 = vmatprep.subr.bf16.mxu0 %v1735
        %1797 = vmatpush1.bf16.msra.mxu0 %v1734
        %1798 = vmatprep.subr.bf16.mxu0 %v1739
        %1799 = vmatpush1.bf16.msra.mxu0 %v1738
        %1800 = vmatprep.subr.bf16.mxu0 %v1743
        %1801 = vmatpush1.bf16.msra.mxu0 %v1742
        %1802 = vmatprep.subr.bf16.mxu0 %v1747
        %1803 = vmatpush1.bf16.msra.mxu0 %v1746
        %1804 = vmatprep.subr.bf16.mxu0 %v1751
        %1805 = vmatpush1.bf16.msra.mxu0 %v1750
        %1806 = vmatprep.subr.bf16.mxu0 %v1755
        %1807 = vmatpush1.bf16.msra.mxu0 %v1754
        %1808 = vmatprep.subr.bf16.mxu0 %v1759
        %1809 = vmatpush1.bf16.msra.mxu0 %v1758
        %1810 = vmatprep.subr.bf16.mxu0 0
        %1811 = vmatpush1.bf16.msra.mxu0 0
        %1812 = vmatprep.subr.bf16.mxu0 0
        %1813 = vmatpush1.bf16.msra.mxu0 0
        %1814 = vmatprep.subr.bf16.mxu0 0
        %1815 = vmatpush1.bf16.msra.mxu0 0
        %1816 = vmatprep.subr.bf16.mxu0 0
        %1817 = vmatpush1.bf16.msra.mxu0 0
        %1818 = vmatprep.subr.bf16.mxu0 0
        %1819 = vmatpush1.bf16.msra.mxu0 0
        %1820 = vmatprep.subr.bf16.mxu0 0
        %1821 = vmatpush1.bf16.msra.mxu0 0
        %1822 = vmatprep.subr.bf16.mxu0 0
        %1823 = vmatpush1.bf16.msra.mxu0 0
        %1824 = vmatprep.subr.bf16.mxu0 0
        %1825 = vmatpush1.bf16.msra.mxu0 0
        %1826 = vmatprep.mubr.bf16.mxu0 0
        %1827 = vmatmul.mubr.bf16.gmra.mrb[0].mxu0 %v1580
        %v1828 = vpop.f32.mrb[0].mxu0
        %v1829 = vadd.f32 %v1617, %v1828
        %v1830 = vpop.f32.mrb[0].mxu0
        %v1831 = vadd.f32 %v1621, %v1830
        %v1832 = vpop.f32.mrb[0].mxu0
        %v1833 = vpop.f32.mrb[0].mxu0
        %1834 = vdwg.mxu0
        %1835 = vmatprep.subr.bf16.mxu0 %v1733
        %1836 = vmatpush1.bf16.msra.mxu0 %v1732
        %1837 = vmatprep.subr.bf16.mxu0 %v1737
        %1838 = vmatpush1.bf16.msra.mxu0 %v1736
        %1839 = vmatprep.subr.bf16.mxu0 %v1741
        %1840 = vmatpush1.bf16.msra.mxu0 %v1740
        %1841 = vmatprep.subr.bf16.mxu0 %v1745
        %1842 = vmatpush1.bf16.msra.mxu0 %v1744
        %1843 = vmatprep.subr.bf16.mxu0 %v1749
        %1844 = vmatpush1.bf16.msra.mxu0 %v1748
        %1845 = vmatprep.subr.bf16.mxu0 %v1753
        %1846 = vmatpush1.bf16.msra.mxu0 %v1752
        %1847 = vmatprep.subr.bf16.mxu0 %v1757
        %1848 = vmatpush1.bf16.msra.mxu0 %v1756
        %1849 = vmatprep.subr.bf16.mxu0 %v1761
        %1850 = vmatpush1.bf16.msra.mxu0 %v1760
        %1851 = vmatprep.subr.bf16.mxu0 0
        %1852 = vmatpush1.bf16.msra.mxu0 0
        %1853 = vmatprep.subr.bf16.mxu0 0
        %1854 = vmatpush1.bf16.msra.mxu0 0
        %1855 = vmatprep.subr.bf16.mxu0 0
        %1856 = vmatpush1.bf16.msra.mxu0 0
        %1857 = vmatprep.subr.bf16.mxu0 0
        %1858 = vmatpush1.bf16.msra.mxu0 0
        %1859 = vmatprep.subr.bf16.mxu0 0
        %1860 = vmatpush1.bf16.msra.mxu0 0
        %1861 = vmatprep.subr.bf16.mxu0 0
        %1862 = vmatpush1.bf16.msra.mxu0 0
        %1863 = vmatprep.subr.bf16.mxu0 0
        %1864 = vmatpush1.bf16.msra.mxu0 0
        %1865 = vmatprep.subr.bf16.mxu0 0
        %1866 = vmatpush1.bf16.msra.mxu0 0
        %1867 = vmatprep.mubr.bf16.mxu0 0
        %1868 = vmatmul.mubr.bf16.gmra.mrb[0].mxu0 %v1580
        %v1869 = vpop.f32.mrb[0].mxu0
        %v1870 = vadd.f32 %v1625, %v1869
        %v1871 = vpop.f32.mrb[0].mxu0
        %v1872 = vadd.f32 %v1629, %v1871
        %v1873 = vpop.f32.mrb[0].mxu0
        %v1874 = vpop.f32.mrb[0].mxu0
        %1875 = vdwg.mxu0
        %v1876 = vmul.f32 %v1829, %v1870
        %v1877 = vmul.f32 %v1831, %v1872
        %v1878 = vpack.c.bf16 %v1876, %v1876
        %v1879 = vpack.c.bf16 %v1877, %v1877
        %v1880 = vld [vmem:[%s16] sm:$0xf]
        %v1881 = vld [vmem:[%s16 + $0x4] sm:$0xf]
        %v1882 = vld [vmem:[%s16 + $0x8] sm:$0xf]
        %v1883 = vld [vmem:[%s16 + $0xc] sm:$0xf]
        %v1884 = vld [vmem:[%s16 + $0x10] sm:$0xf]
        %v1885 = vld [vmem:[%s16 + $0x14] sm:$0xf]
        %v1886 = vld [vmem:[%s16 + $0x18] sm:$0xf]
        %v1887 = vld [vmem:[%s16 + $0x1c] sm:$0xf]
        %v1888 = vld [vmem:[%s16 + $0x20] sm:$0xf]
        %v1889 = vld [vmem:[%s16 + $0x24] sm:$0xf]
        %v1890 = vld [vmem:[%s16 + $0x28] sm:$0xf]
        %v1891 = vld [vmem:[%s16 + $0x2c] sm:$0xf]
        %v1892 = vld [vmem:[%s16 + $0x30] sm:$0xf]
        %v1893 = vld [vmem:[%s16 + $0x34] sm:$0xf]
        %v1894 = vld [vmem:[%s16 + $0x38] sm:$0xf]
        %v1895 = vld [vmem:[%s16 + $0x3c] sm:$0xf]
        %v1896 = vld [vmem:[%s16 + $0x40] sm:$0xf]
        %v1897 = vld [vmem:[%s16 + $0x44] sm:$0xf]
        %v1898 = vld [vmem:[%s16 + $0x48] sm:$0xf]
        %v1899 = vld [vmem:[%s16 + $0x4c] sm:$0xf]
        %v1900 = vld [vmem:[%s16 + $0x50] sm:$0xf]
        %v1901 = vld [vmem:[%s16 + $0x54] sm:$0xf]
        %v1902 = vld [vmem:[%s16 + $0x58] sm:$0xf]
        %v1903 = vld [vmem:[%s16 + $0x5c] sm:$0xf]
        %v1904 = vld [vmem:[%s16 + $0x60] sm:$0xf]
        %v1905 = vld [vmem:[%s16 + $0x64] sm:$0xf]
        %v1906 = vld [vmem:[%s16 + $0x68] sm:$0xf]
        %v1907 = vld [vmem:[%s16 + $0x6c] sm:$0xf]
        %v1908 = vld [vmem:[%s16 + $0x70] sm:$0xf]
        %v1909 = vld [vmem:[%s16 + $0x74] sm:$0xf]
        %v1910 = vld [vmem:[%s16 + $0x78] sm:$0xf]
        %v1911 = vld [vmem:[%s16 + $0x7c] sm:$0xf]
        %v1913 = vlaneseq
        %v1914 = vshrl.u32 %v1913, 7
        %v1915 = vsub.s32 0, %v1914
        %v1916 = vrot.slane %v1315, %v1915
        %v1950 = vunpack.c.l.b16 %v1880
        %v1951 = vunpack.c.l.b16 %v1881
        %v1952 = vunpack.c.l.b16 %v1882
        %v1953 = vunpack.c.l.b16 %v1883
        %v1954 = vunpack.c.l.b16 %v1884
        %v1955 = vunpack.c.l.b16 %v1885
        %v1956 = vunpack.c.l.b16 %v1886
        %v1957 = vunpack.c.l.b16 %v1887
        %v1958 = vunpack.c.l.b16 %v1888
        %v1959 = vunpack.c.l.b16 %v1889
        %v1960 = vunpack.c.l.b16 %v1890
        %v1961 = vunpack.c.l.b16 %v1891
        %v1962 = vunpack.c.l.b16 %v1892
        %v1963 = vunpack.c.l.b16 %v1893
        %v1964 = vunpack.c.l.b16 %v1894
        %v1965 = vunpack.c.l.b16 %v1895
        %v1966 = vunpack.c.l.b16 %v1896
        %v1967 = vunpack.c.l.b16 %v1897
        %v1968 = vunpack.c.l.b16 %v1898
        %v1969 = vunpack.c.l.b16 %v1899
        %v1970 = vunpack.c.l.b16 %v1900
        %v1971 = vunpack.c.l.b16 %v1901
        %v1972 = vunpack.c.l.b16 %v1902
        %v1973 = vunpack.c.l.b16 %v1903
        %v1974 = vunpack.c.l.b16 %v1904
        %v1975 = vunpack.c.l.b16 %v1905
        %v1976 = vunpack.c.l.b16 %v1906
        %v1977 = vunpack.c.l.b16 %v1907
        %v1978 = vunpack.c.l.b16 %v1908
        %v1979 = vunpack.c.l.b16 %v1909
        %v1980 = vunpack.c.l.b16 %v1910
        %v1981 = vunpack.c.l.b16 %v1911
        %v1982 = vpack.c.b16 %v1951, %v1950
        %v1983 = vpack.c.b16 %v1953, %v1952
        %v1984 = vpack.c.b16 %v1955, %v1954
        %v1985 = vpack.c.b16 %v1957, %v1956
        %v1986 = vpack.c.b16 %v1959, %v1958
        %v1987 = vpack.c.b16 %v1961, %v1960
        %v1988 = vpack.c.b16 %v1963, %v1962
        %v1989 = vpack.c.b16 %v1965, %v1964
        %v1990 = vpack.c.b16 %v1967, %v1966
        %v1991 = vpack.c.b16 %v1969, %v1968
        %v1992 = vpack.c.b16 %v1971, %v1970
        %v1993 = vpack.c.b16 %v1973, %v1972
        %v1994 = vpack.c.b16 %v1975, %v1974
        %v1995 = vpack.c.b16 %v1977, %v1976
        %v1996 = vpack.c.b16 %v1979, %v1978
        %v1997 = vpack.c.b16 %v1981, %v1980
        %2014 = vmatprep.subr.bf16.mxu0 0
        %2015 = vmatpush1.bf16.msra.mxu0 %v1982
        %2016 = vmatprep.subr.bf16.mxu0 0
        %2017 = vmatpush1.bf16.msra.mxu0 %v1983
        %2018 = vmatprep.subr.bf16.mxu0 0
        %2019 = vmatpush1.bf16.msra.mxu0 %v1984
        %2020 = vmatprep.subr.bf16.mxu0 0
        %2021 = vmatpush1.bf16.msra.mxu0 %v1985
        %2022 = vmatprep.subr.bf16.mxu0 0
        %2023 = vmatpush1.bf16.msra.mxu0 %v1986
        %2024 = vmatprep.subr.bf16.mxu0 0
        %2025 = vmatpush1.bf16.msra.mxu0 %v1987
        %2026 = vmatprep.subr.bf16.mxu0 0
        %2027 = vmatpush1.bf16.msra.mxu0 %v1988
        %2028 = vmatprep.subr.bf16.mxu0 0
        %2029 = vmatpush1.bf16.msra.mxu0 %v1989
        %2030 = vmatprep.subr.bf16.mxu0 0
        %2031 = vmatpush1.bf16.msra.mxu0 %v1990
        %2032 = vmatprep.subr.bf16.mxu0 0
        %2033 = vmatpush1.bf16.msra.mxu0 %v1991
        %2034 = vmatprep.subr.bf16.mxu0 0
        %2035 = vmatpush1.bf16.msra.mxu0 %v1992
        %2036 = vmatprep.subr.bf16.mxu0 0
        %2037 = vmatpush1.bf16.msra.mxu0 %v1993
        %2038 = vmatprep.subr.bf16.mxu0 0
        %2039 = vmatpush1.bf16.msra.mxu0 %v1994
        %2040 = vmatprep.subr.bf16.mxu0 0
        %2041 = vmatpush1.bf16.msra.mxu0 %v1995
        %2042 = vmatprep.subr.bf16.mxu0 0
        %2043 = vmatpush1.bf16.msra.mxu0 %v1996
        %2044 = vmatprep.subr.bf16.mxu0 0
        %2045 = vmatpush1.bf16.msra.mxu0 %v1997
        %2046 = vmatprep.mubr.bf16.mxu0 %v1879
        %2047 = vmatmul.mubr.bf16.gmra.mrb[0].mxu0 %v1878
        %v2048 = vpop.f32.mrb[0].mxu0
        %v2049 = vadd.f32 %v1916, %v2048
        %v2050 = vpop.f32.mrb[0].mxu0
        %v2051 = vpop.f32.mrb[0].mxu0
        %v2052 = vpop.f32.mrb[0].mxu0
        %2053 = vdwg.mxu0
        %2054 = vst [vmem:[%s18] sm:$0x3] %v2049
      $region110: #{gnn_head_forward.1} parent=79 // pred_fallthru
        _
      // Predicated region
      $region118: #{gnn_head_forward.1} parent=79 // pred_check
        %p2055 = pneg %p401
      $region119: #{gnn_head_forward.1} parent=79 // pred_check_branch
        %2057 = sbr.rel (%p2055) target = $region121
      $region120: #{gnn_head_forward.1} parent=79 // pred_region
        _
      $region121: #{gnn_head_forward.1} parent=79 // pred_fallthru
        _
      // Predicated region
      $region122: #{gnn_head_forward.1} parent=79 // pred_check
        %p2058 = pneg %p401
      $region123: #{gnn_head_forward.1} parent=79 // pred_check_branch
        %2060 = sbr.rel (%p2058) target = $region125
      $region124: #{gnn_head_forward.1} parent=79 // pred_region
        _
      $region125: #{gnn_head_forward.1} parent=79 // pred_fallthru
        _
    $region80: #{gnn_head_forward.1} parent=5 // pred_fallthru
      _
    %p2061 = scmp.le.s32.totalorder 2, %s38
    // Predicated region
    $region126: #{gnn_head_forward.1} parent=5 // pred_check
      %p2062 = pneg %p2061
    $region127: #{gnn_head_forward.1} parent=5 // pred_check_branch
      %2064 = sbr.rel (%p2062) target = $region129
    $region128: #{gnn_head_forward.1} parent=5 // pred_region
      %s2065 = ssub.s32 %s38, 2
    $region129: #{gnn_head_forward.1} parent=5 // pred_fallthru
      _
  $region6: #{gnn_head_forward.1} parent=0 // loop_footer
    %s42 = sadd.s32 1, %s38
  $region7: #{gnn_head_forward.1} parent=0 // loop_footer_branch
    %37 = sbr.rel target = $region3
  $region8: #{gnn_head_forward.1} parent=0 // loop_exit
    _

</llo_original>
